<compile_context>
chip_gen: v7x
topology: tpu7x:2x2x1
jax: 0.10.0
libtpu: 0.0.40
codegen_flags: <defaults>
</compile_context>

<pallas_src>
import functools

import jax
import jax.numpy as jnp
import numpy as np
from jax import lax
from jax.experimental import pallas as pl
from jax.experimental.pallas import tpu as pltpu

# ---------------------------------------------------------------------------
# Module configuration (mirrors Iteration.__init__)
# ---------------------------------------------------------------------------
KERNEL_SIZE = (3, 3)          # CircularConv2d kernel (odd => output shape == input shape)
N_TAYLOR = 3                  # taylor_nb_iterations
ALPHA, BETA0, BETA1, SIGMA = 0.5, 0.1, 0.2, 0.3
DECIM_ROW, DECIM_COL = 2, 2


# ---------------------------------------------------------------------------
# In-kernel helpers
# ---------------------------------------------------------------------------
def _roll2(x, s0, s1):
    """np.roll semantics, implemented with the TPU-native (XLU) rotate."""
    h, w = x.shape
    s0 %= h
    s1 %= w
    if s0:
        x = pltpu.roll(x, s0, 0)
    if s1:
        x = pltpu.roll(x, s1, 1)
    return x


def _lane_rolled(x, kw):
    """[roll(x, m - b, axis=1) for b in range(kw)]  (kw-1 lane rolls; center is x)."""
    m = kw // 2
    return [_roll2(x, 0, m - b) for b in range(kw)]


def _corr_from_lane_rolled(lane_rolled, taps, kh):
    """Circular cross-correlation given pre-rolled lane copies.

    out = sum_a roll( sum_b taps[a][b] * lane_rolled[b], n - a, axis=0 )
    Rolls are linear, so this equals the per-tap formulation but uses only
    kh-1 sublane rolls instead of one roll pair per tap.
    """
    n = kh // 2
    acc = None
    for a in range(kh):
        row = None
        for b, c in enumerate(lane_rolled):
            t = taps[a][b] * c               # scalar tap * vreg tile
            row = t if row is None else row + t
        row = _roll2(row, n - a, 0)
        acc = row if acc is None else acc + row
    return acc


def _circ_corr(x, taps, kh, kw):
    """Circular cross-correlation == CircularConv2d.forward for odd kernels."""
    return _corr_from_lane_rolled(_lane_rolled(x, kw), taps, kh)


# ---------------------------------------------------------------------------
# The Pallas kernel: the whole Iteration.forward for one (H, W) field
# ---------------------------------------------------------------------------
def _iteration_kernel(params_ref, w_ref,
                      stg_ref, dx_ref, dy_ref, bx_ref, by_ref,
                      f_out, dx_out, dy_out, bx_out, by_out,
                      *, kh, kw, n_taylor, decim_row, decim_col):
    H, W = f_out.shape

    # ---- scalars, hoisted once --------------------------------------------
    alpha = params_ref[0]
    beta0 = params_ref[1]
    beta1 = params_ref[2]
    sigma = params_ref[3]
    beta0_plus_sigma = beta0 + sigma
    thr = beta1 / sigma
    thr_sq = thr * thr

    # Conv taps: read each SMEM element exactly once.  For odd kernels,
    # h.T (flip-H -> circular conv -> flip-H, exactly CircularConv2d.T on a
    # (1,H,W) tensor) == circular cross-correlation with taps flipped along H.
    # alpha is folded into the h.T taps (9 scalar muls) so no full-image
    # "alpha *" multiplies remain anywhere in the kernel.
    taps_w = [[w_ref[a, b] for b in range(kw)] for a in range(kh)]
    taps_wT_alpha = [[alpha * taps_w[kh - 1 - a][b] for b in range(kw)]
                     for a in range(kh)]

    d_x = dx_ref[...]
    d_y = dy_ref[...]
    b_x = bx_ref[...]
    b_y = by_ref[...]
    stg = stg_ref[...]

    # ---- decimation mask S^T S, generated in-kernel (no HBM traffic) -------
    if decim_row == 1 and decim_col == 1:
        mask = None
    else:
        rows = lax.broadcasted_iota(jnp.int32, (H, W), 0)
        cols = lax.broadcasted_iota(jnp.int32, (H, W), 1)
        mask = jnp.logical_and((rows % decim_row) == 0,
                               (cols % decim_col) == 0)

    # ---- Utils.* (periodic finite differences) -----------------------------
    def dX(v):  return _roll2(v, 0, -1) - v            # Utils.dx
    def dY(v):  return _roll2(v, -1, 0) - v            # Utils.dy
    def dXT(v): return _roll2(v, 0, 1) - v             # Utils.dxT
    def dYT(v): return _roll2(v, 1, 0) - v             # Utils.dyT

    # ---- forward ------------------------------------------------------------
    gradT_x = dXT(d_x - b_x)
    gradT_y = dYT(d_y - b_y)
    x = sigma * (gradT_x + gradT_y) + _circ_corr(stg, taps_wT_alpha, kh, kw)

    # taylor_young_ld: ld_k = x - compute(ld_{k-1}); fori_loop(unroll=True)
    # keeps ld as the only value live across iterations.
    def taylor_body(_, ld):
        ld_lanes = _lane_rolled(ld, kw)                        # shared: h(ld) & lap(ld)
        out1 = _corr_from_lane_rolled(ld_lanes, taps_w, kh)    # self.h(ld)
        out3 = out1 if mask is None else jnp.where(mask, out1, 0.0)  # S^T S
        term1 = _circ_corr(out3, taps_wT_alpha, kh, kw)        # alpha * self.h.T(.)
        # Utils.laplacian2D_v2: 5-point circular laplacian; reuse the +/-1
        # lane-rolled copies from the conv when the conv width is 3.
        if kw == 3:
            lap_u = (_roll2(ld, 1, 0) + _roll2(ld, -1, 0)
                     + ld_lanes[0] + ld_lanes[2] - 4.0 * ld)
        else:
            lap_u = (_roll2(ld, 1, 0) + _roll2(ld, -1, 0)
                     + _roll2(ld, 0, 1) + _roll2(ld, 0, -1) - 4.0 * ld)
        # ld_new = x - compute(ld) = x - (ld - term1 - (beta0+sigma)*lap)
        return (x - ld) + term1 + beta0_plus_sigma * lap_u

    f = lax.fori_loop(0, n_taylor, taylor_body, x, unroll=True)

    # Store f immediately so this store hides under the shrinkage compute
    # (v5e has a single vector-store slot).
    f_out[...] = f

    dx_f = dX(f)
    dy_f = dY(f)
    vx = dx_f + b_x
    vy = dy_f + b_y

    # Utils.multidimensional_soft([vx, vy], beta1/sigma): isotropic shrinkage.
    #   max(mag - thr, 0)/mag == where(|v|^2 > thr^2, 1 - thr*rsqrt(|v|^2), 0)
    # Single EUP rsqrt; the -inf in the untaken branch at |v|=0 is masked by
    # the select (no NaN: thr*inf = inf, 1 - inf = -inf).
    msq = vx * vx + vy * vy
    factor = jnp.where(msq > thr_sq, 1.0 - thr * lax.rsqrt(msq), 0.0)

    d_x_new = factor * vx
    dx_out[...] = d_x_new
    bx_out[...] = b_x + dx_f - d_x_new
    d_y_new = factor * vy
    dy_out[...] = d_y_new
    by_out[...] = b_y + dy_f - d_y_new


# ---------------------------------------------------------------------------
# Wrapper
# ---------------------------------------------------------------------------
def _vmem_limit_bytes() -> int:
    """~85% of physical VMEM (128 MiB on v5e/v6e, 64 MiB on v7x) with headroom."""
    try:
        cap = int(pltpu.get_tpu_info().vmem_capacity_bytes)
    except Exception:  # pragma: no cover - conservative fallback
        cap = 64 * 2 ** 20
    return max(32 * 2 ** 20, int(cap * 0.85))


@functools.partial(jax.jit, static_argnames=("decim_row", "decim_col", "n_taylor"))
def iteration_forward(stg, d_x, d_y, b_x, b_y, weight, params,
                      *, decim_row, decim_col, n_taylor):
    H, W = stg.shape
    kh, kw = weight.shape
    if kh % 2 != 1 or kw % 2 != 1:
        raise ValueError("odd kernel required to preserve spatial shape")
    if H % 8 != 0 or W % 128 != 0:
        # Padding is NOT legal here: the operator is circular, so the wrap
        # boundary must sit exactly at (H, W); unaligned lane rolls and masked
        # partial stores are also the slow path on TPU.
        # TODO(synk): ragged-shape support (masked wrap) not implemented.
        raise ValueError(f"H must be a multiple of 8 and W of 128; got {(H, W)}")

    kernel = functools.partial(_iteration_kernel, kh=kh, kw=kw, n_taylor=n_taylor,
                               decim_row=decim_row, decim_col=decim_col)
    smem = pl.BlockSpec(memory_space=pltpu.MemorySpace.SMEM)
    vmem = pl.BlockSpec(memory_space=pltpu.MemorySpace.VMEM)
    out_sds = jax.ShapeDtypeStruct((H, W), jnp.float32)

    return pl.pallas_call(
        kernel,
        out_shape=(out_sds,) * 5,
        in_specs=[smem, smem,                       # params, conv taps -> SMEM scalars
                  vmem, vmem, vmem, vmem, vmem],    # STg, d_x, d_y, b_x, b_y
        out_specs=(vmem,) * 5,
        # d_x/d_y/b_x/b_y are updated in place across split-Bregman iterations:
        # alias them so callers that donate these buffers avoid HBM copies.
        input_output_aliases={3: 1, 4: 2, 5: 3, 6: 4},
        compiler_params=pltpu.CompilerParams(vmem_limit_bytes=_vmem_limit_bytes()),
    )(params.astype(jnp.float32), weight.astype(jnp.float32),
      stg, d_x, d_y, b_x, b_y)


# ---------------------------------------------------------------------------
# Pure-JAX reference (same Utils definitions), for a correctness self-check
# ---------------------------------------------------------------------------
def _ref_forward(stg, d_x, d_y, b_x, b_y, weight, params,
                 *, decim_row, decim_col, n_taylor):
    alpha, beta0, beta1, sigma = params[0], params[1], params[2], params[3]
    kh, kw = weight.shape
    n, m = kh // 2, kw // 2
    H, W = stg.shape

    def circ_corr(x, wk):
        acc = jnp.zeros_like(x)
        for a in range(kh):
            for b in range(kw):
                acc = acc + wk[a, b] * jnp.roll(jnp.roll(x, n - a, axis=0), m - b, axis=1)
        return acc

    def h(u):
        return circ_corr(u, weight)

    def hT(u):                                # literal flip(H) -> conv -> flip(H)
        return circ_corr(u[::-1, :], weight)[::-1, :]

    def dX(v):  return jnp.roll(v, -1, 1) - v
    def dY(v):  return jnp.roll(v, -1, 0) - v
    def dXT(v): return jnp.roll(v, 1, 1) - v
    def dYT(v): return jnp.roll(v, 1, 0) - v
    def lap(u):
        return (jnp.roll(u, 1, 0) + jnp.roll(u, -1, 0)
                + jnp.roll(u, 1, 1) + jnp.roll(u, -1, 1) - 4.0 * u)

    mask = (((jnp.arange(H)[:, None] % decim_row) == 0)
            & ((jnp.arange(W)[None, :] % decim_col) == 0)).astype(stg.dtype)

    x = sigma * (dXT(d_x - b_x) + dYT(d_y - b_y)) + alpha * hT(stg)
    ld = x
    for _ in range(n_taylor):
        comp = ld - alpha * hT(mask * h(ld)) - (beta0 + sigma) * lap(ld)
        ld = x - comp
    f = ld

    dx_f, dy_f = dX(f), dY(f)
    vx, vy = dx_f + b_x, dy_f + b_y
    thr = beta1 / sigma
    mag = jnp.sqrt(vx * vx + vy * vy)
    nz = mag > 0.0
    factor = jnp.where(nz, jnp.maximum(mag - thr, 0.0) / jnp.where(nz, mag, 1.0), 0.0)
    d_x_n, d_y_n = factor * vx, factor * vy
    return f, d_x_n, d_y_n, b_x + dx_f - d_x_n, b_y + dy_f - d_y_n


# ---------------------------------------------------------------------------
if __name__ == "__main__":
    H, W = 16, 128
    key = jax.random.PRNGKey(0)
    ks = jax.random.split(key, 6)
    stg = jax.random.normal(ks[0], (H, W), jnp.float32)
    d_x = jax.random.normal(ks[1], (H, W), jnp.float32)
    d_y = jax.random.normal(ks[2], (H, W), jnp.float32)
    b_x = jax.random.normal(ks[3], (H, W), jnp.float32)
    b_y = jax.random.normal(ks[4], (H, W), jnp.float32)

    # Deterministic conv weight (Conv2d-style uniform in +/- 1/sqrt(fan_in)).
    fan_in = KERNEL_SIZE[0] * KERNEL_SIZE[1]
    bound = 1.0 / (fan_in ** 0.5)
    weight = jax.random.uniform(ks[5], KERNEL_SIZE, jnp.float32, -bound, bound)

    params = jnp.array([ALPHA, BETA0, BETA1, SIGMA], jnp.float32)

    outs = iteration_forward(stg, d_x, d_y, b_x, b_y, weight, params,
                             decim_row=DECIM_ROW, decim_col=DECIM_COL,
                             n_taylor=N_TAYLOR)
    outs = jax.block_until_ready(outs)

    refs = _ref_forward(stg, d_x, d_y, b_x, b_y, weight, params,
                        decim_row=DECIM_ROW, decim_col=DECIM_COL,
                        n_taylor=N_TAYLOR)
    for name, o, r in zip(["f", "d_x", "d_y", "b_x", "b_y"], outs, refs):
        np.testing.assert_allclose(np.asarray(o), np.asarray(r),
                                   rtol=1e-4, atol=1e-4, err_msg=name)

    print("KERNEL_OK")
</pallas_src>

<mosaic_0001>
module attributes {stable_mosaic.version = 11 : i64} {
  func.func @_iteration_kernel(%arg0: memref<4xf32, #tpu.memory_space<smem>>, %arg1: memref<3x3xf32, #tpu.memory_space<smem>>, %arg2: memref<16x128xf32, #tpu.memory_space<vmem>>, %arg3: memref<16x128xf32, #tpu.memory_space<vmem>>, %arg4: memref<16x128xf32, #tpu.memory_space<vmem>>, %arg5: memref<16x128xf32, #tpu.memory_space<vmem>>, %arg6: memref<16x128xf32, #tpu.memory_space<vmem>>, %arg7: memref<16x128xf32, #tpu.memory_space<vmem>>, %arg8: memref<16x128xf32, #tpu.memory_space<vmem>>, %arg9: memref<16x128xf32, #tpu.memory_space<vmem>>, %arg10: memref<16x128xf32, #tpu.memory_space<vmem>>, %arg11: memref<16x128xf32, #tpu.memory_space<vmem>>) attributes {dimension_semantics = [], scalar_prefetch = 0 : i64, scratch_operands = 0 : i64, tpu.core_type = #tpu.core_type<tc>} {
    %c0 = arith.constant 0 : index
    %0 = memref.load %arg0[%c0] : memref<4xf32, #tpu.memory_space<smem>>
    %c1 = arith.constant 1 : index
    %1 = memref.load %arg0[%c1] : memref<4xf32, #tpu.memory_space<smem>>
    %c2 = arith.constant 2 : index
    %2 = memref.load %arg0[%c2] : memref<4xf32, #tpu.memory_space<smem>>
    %c3 = arith.constant 3 : index
    %3 = memref.load %arg0[%c3] : memref<4xf32, #tpu.memory_space<smem>>
    %4 = arith.addf %1, %3 : f32
    %5 = arith.divf %2, %3 : f32
    %6 = arith.mulf %5, %5 : f32
    %c0_0 = arith.constant 0 : index
    %c0_1 = arith.constant 0 : index
    %7 = memref.load %arg1[%c0_0, %c0_1] : memref<3x3xf32, #tpu.memory_space<smem>>
    %c0_2 = arith.constant 0 : index
    %c1_3 = arith.constant 1 : index
    %8 = memref.load %arg1[%c0_2, %c1_3] : memref<3x3xf32, #tpu.memory_space<smem>>
    %c0_4 = arith.constant 0 : index
    %c2_5 = arith.constant 2 : index
    %9 = memref.load %arg1[%c0_4, %c2_5] : memref<3x3xf32, #tpu.memory_space<smem>>
    %c1_6 = arith.constant 1 : index
    %c0_7 = arith.constant 0 : index
    %10 = memref.load %arg1[%c1_6, %c0_7] : memref<3x3xf32, #tpu.memory_space<smem>>
    %c1_8 = arith.constant 1 : index
    %c1_9 = arith.constant 1 : index
    %11 = memref.load %arg1[%c1_8, %c1_9] : memref<3x3xf32, #tpu.memory_space<smem>>
    %c1_10 = arith.constant 1 : index
    %c2_11 = arith.constant 2 : index
    %12 = memref.load %arg1[%c1_10, %c2_11] : memref<3x3xf32, #tpu.memory_space<smem>>
    %c2_12 = arith.constant 2 : index
    %c0_13 = arith.constant 0 : index
    %13 = memref.load %arg1[%c2_12, %c0_13] : memref<3x3xf32, #tpu.memory_space<smem>>
    %c2_14 = arith.constant 2 : index
    %c1_15 = arith.constant 1 : index
    %14 = memref.load %arg1[%c2_14, %c1_15] : memref<3x3xf32, #tpu.memory_space<smem>>
    %c2_16 = arith.constant 2 : index
    %c2_17 = arith.constant 2 : index
    %15 = memref.load %arg1[%c2_16, %c2_17] : memref<3x3xf32, #tpu.memory_space<smem>>
    %16 = arith.mulf %0, %13 : f32
    %17 = arith.mulf %0, %14 : f32
    %18 = arith.mulf %0, %15 : f32
    %19 = arith.mulf %0, %10 : f32
    %20 = arith.mulf %0, %11 : f32
    %21 = arith.mulf %0, %12 : f32
    %22 = arith.mulf %0, %7 : f32
    %23 = arith.mulf %0, %8 : f32
    %24 = arith.mulf %0, %9 : f32
    %c0_18 = arith.constant 0 : index
    %c0_19 = arith.constant 0 : index
    %25 = vector.load %arg3[%c0_18, %c0_19] : memref<16x128xf32, #tpu.memory_space<vmem>>, vector<16x128xf32>
    %c0_20 = arith.constant 0 : index
    %c0_21 = arith.constant 0 : index
    %26 = vector.load %arg4[%c0_20, %c0_21] : memref<16x128xf32, #tpu.memory_space<vmem>>, vector<16x128xf32>
    %c0_22 = arith.constant 0 : index
    %c0_23 = arith.constant 0 : index
    %27 = vector.load %arg5[%c0_22, %c0_23] : memref<16x128xf32, #tpu.memory_space<vmem>>, vector<16x128xf32>
    %c0_24 = arith.constant 0 : index
    %c0_25 = arith.constant 0 : index
    %28 = vector.load %arg6[%c0_24, %c0_25] : memref<16x128xf32, #tpu.memory_space<vmem>>, vector<16x128xf32>
    %c0_26 = arith.constant 0 : index
    %c0_27 = arith.constant 0 : index
    %29 = vector.load %arg2[%c0_26, %c0_27] : memref<16x128xf32, #tpu.memory_space<vmem>>, vector<16x128xf32>
    %30 = tpu.iota {dimensions = array<i32: 0>} : vector<16x128xi32>
    %31 = tpu.iota {dimensions = array<i32: 1>} : vector<16x128xi32>
    %c2_i32 = arith.constant 2 : i32
    %c0_i32 = arith.constant 0 : i32
    %32 = arith.cmpi eq, %c2_i32, %c0_i32 : i32
    %c1_i32 = arith.constant 1 : i32
    %33 = arith.select %32, %c1_i32, %c2_i32 : i32
    %34 = vector.broadcast %33 : i32 to vector<16x128xi32>
    %35 = arith.remsi %30, %34 : vector<16x128xi32>
    %c0_i32_28 = arith.constant 0 : i32
    %36 = vector.broadcast %c0_i32_28 : i32 to vector<16x128xi32>
    %37 = arith.cmpi ne, %35, %36 : vector<16x128xi32>
    %c0_i32_29 = arith.constant 0 : i32
    %38 = vector.broadcast %c0_i32_29 : i32 to vector<16x128xi32>
    %39 = arith.cmpi slt, %35, %38 : vector<16x128xi32>
    %c0_i32_30 = arith.constant 0 : i32
    %40 = arith.cmpi slt, %33, %c0_i32_30 : i32
    %41 = vector.broadcast %40 : i1 to vector<16x128xi1>
    %42 = vector.broadcast %41 : vector<16x128xi1> to vector<16x128xi1>
    %43 = arith.xori %39, %42 : vector<16x128xi1>
    %44 = arith.andi %43, %37 : vector<16x128xi1>
    %45 = vector.broadcast %33 : i32 to vector<16x128xi32>
    %46 = arith.addi %35, %45 : vector<16x128xi32>
    %47 = arith.select %44, %46, %35 : vector<16x128xi1>, vector<16x128xi32>
    %c0_i32_31 = arith.constant 0 : i32
    %48 = vector.broadcast %c0_i32_31 : i32 to vector<16x128xi32>
    %49 = arith.cmpi eq, %47, %48 : vector<16x128xi32>
    %c2_i32_32 = arith.constant 2 : i32
    %c0_i32_33 = arith.constant 0 : i32
    %50 = arith.cmpi eq, %c2_i32_32, %c0_i32_33 : i32
    %c1_i32_34 = arith.constant 1 : i32
    %51 = arith.select %50, %c1_i32_34, %c2_i32_32 : i32
    %52 = vector.broadcast %51 : i32 to vector<16x128xi32>
    %53 = arith.remsi %31, %52 : vector<16x128xi32>
    %c0_i32_35 = arith.constant 0 : i32
    %54 = vector.broadcast %c0_i32_35 : i32 to vector<16x128xi32>
    %55 = arith.cmpi ne, %53, %54 : vector<16x128xi32>
    %c0_i32_36 = arith.constant 0 : i32
    %56 = vector.broadcast %c0_i32_36 : i32 to vector<16x128xi32>
    %57 = arith.cmpi slt, %53, %56 : vector<16x128xi32>
    %c0_i32_37 = arith.constant 0 : i32
    %58 = arith.cmpi slt, %51, %c0_i32_37 : i32
    %59 = vector.broadcast %58 : i1 to vector<16x128xi1>
    %60 = vector.broadcast %59 : vector<16x128xi1> to vector<16x128xi1>
    %61 = arith.xori %57, %60 : vector<16x128xi1>
    %62 = arith.andi %61, %55 : vector<16x128xi1>
    %63 = vector.broadcast %51 : i32 to vector<16x128xi32>
    %64 = arith.addi %53, %63 : vector<16x128xi32>
    %65 = arith.select %62, %64, %53 : vector<16x128xi1>, vector<16x128xi32>
    %c0_i32_38 = arith.constant 0 : i32
    %66 = vector.broadcast %c0_i32_38 : i32 to vector<16x128xi32>
    %67 = arith.cmpi eq, %65, %66 : vector<16x128xi32>
    %68 = arith.andi %49, %67 : vector<16x128xi1>
    %69 = arith.subf %25, %27 : vector<16x128xf32>
    %c1_i32_39 = arith.constant 1 : i32
    %70 = tpu.dynamic_rotate %69 by %c1_i32_39 dim 1 : vector<16x128xf32>, i32 -> vector<16x128xf32>
    %71 = arith.subf %70, %69 : vector<16x128xf32>
    %72 = arith.subf %26, %28 : vector<16x128xf32>
    %c1_i32_40 = arith.constant 1 : i32
    %73 = tpu.dynamic_rotate %72 by %c1_i32_40 dim 0 : vector<16x128xf32>, i32 -> vector<16x128xf32>
    %74 = arith.subf %73, %72 : vector<16x128xf32>
    %75 = arith.addf %71, %74 : vector<16x128xf32>
    %76 = vector.broadcast %3 : f32 to vector<16x128xf32>
    %77 = arith.mulf %76, %75 : vector<16x128xf32>
    %c1_i32_41 = arith.constant 1 : i32
    %78 = tpu.dynamic_rotate %29 by %c1_i32_41 dim 1 : vector<16x128xf32>, i32 -> vector<16x128xf32>
    %c127_i32 = arith.constant 127 : i32
    %79 = tpu.dynamic_rotate %29 by %c127_i32 dim 1 : vector<16x128xf32>, i32 -> vector<16x128xf32>
    %80 = vector.broadcast %16 : f32 to vector<16x128xf32>
    %81 = arith.mulf %80, %78 : vector<16x128xf32>
    %82 = vector.broadcast %17 : f32 to vector<16x128xf32>
    %83 = arith.mulf %82, %29 : vector<16x128xf32>
    %84 = arith.addf %81, %83 : vector<16x128xf32>
    %85 = vector.broadcast %18 : f32 to vector<16x128xf32>
    %86 = arith.mulf %85, %79 : vector<16x128xf32>
    %87 = arith.addf %84, %86 : vector<16x128xf32>
    %c1_i32_42 = arith.constant 1 : i32
    %88 = tpu.dynamic_rotate %87 by %c1_i32_42 dim 0 : vector<16x128xf32>, i32 -> vector<16x128xf32>
    %89 = vector.broadcast %19 : f32 to vector<16x128xf32>
    %90 = arith.mulf %89, %78 : vector<16x128xf32>
    %91 = vector.broadcast %20 : f32 to vector<16x128xf32>
    %92 = arith.mulf %91, %29 : vector<16x128xf32>
    %93 = arith.addf %90, %92 : vector<16x128xf32>
    %94 = vector.broadcast %21 : f32 to vector<16x128xf32>
    %95 = arith.mulf %94, %79 : vector<16x128xf32>
    %96 = arith.addf %93, %95 : vector<16x128xf32>
    %97 = arith.addf %88, %96 : vector<16x128xf32>
    %98 = vector.broadcast %22 : f32 to vector<16x128xf32>
    %99 = arith.mulf %98, %78 : vector<16x128xf32>
    %100 = vector.broadcast %23 : f32 to vector<16x128xf32>
    %101 = arith.mulf %100, %29 : vector<16x128xf32>
    %102 = arith.addf %99, %101 : vector<16x128xf32>
    %103 = vector.broadcast %24 : f32 to vector<16x128xf32>
    %104 = arith.mulf %103, %79 : vector<16x128xf32>
    %105 = arith.addf %102, %104 : vector<16x128xf32>
    %c15_i32 = arith.constant 15 : i32
    %106 = tpu.dynamic_rotate %105 by %c15_i32 dim 0 : vector<16x128xf32>, i32 -> vector<16x128xf32>
    %107 = arith.addf %97, %106 : vector<16x128xf32>
    %108 = arith.addf %77, %107 : vector<16x128xf32>
    %c0_i32_43 = arith.constant 0 : i32
    %c1_i32_44 = arith.constant 1 : i32
    %109 = tpu.dynamic_rotate %108 by %c1_i32_44 dim 1 : vector<16x128xf32>, i32 -> vector<16x128xf32>
    %c127_i32_45 = arith.constant 127 : i32
    %110 = tpu.dynamic_rotate %108 by %c127_i32_45 dim 1 : vector<16x128xf32>, i32 -> vector<16x128xf32>
    %111 = vector.broadcast %7 : f32 to vector<16x128xf32>
    %112 = arith.mulf %111, %109 : vector<16x128xf32>
    %113 = vector.broadcast %8 : f32 to vector<16x128xf32>
    %114 = arith.mulf %113, %108 : vector<16x128xf32>
    %115 = arith.addf %112, %114 : vector<16x128xf32>
    %116 = vector.broadcast %9 : f32 to vector<16x128xf32>
    %117 = arith.mulf %116, %110 : vector<16x128xf32>
    %118 = arith.addf %115, %117 : vector<16x128xf32>
    %c1_i32_46 = arith.constant 1 : i32
    %119 = tpu.dynamic_rotate %118 by %c1_i32_46 dim 0 : vector<16x128xf32>, i32 -> vector<16x128xf32>
    %120 = vector.broadcast %10 : f32 to vector<16x128xf32>
    %121 = arith.mulf %120, %109 : vector<16x128xf32>
    %122 = vector.broadcast %11 : f32 to vector<16x128xf32>
    %123 = arith.mulf %122, %108 : vector<16x128xf32>
    %124 = arith.addf %121, %123 : vector<16x128xf32>
    %125 = vector.broadcast %12 : f32 to vector<16x128xf32>
    %126 = arith.mulf %125, %110 : vector<16x128xf32>
    %127 = arith.addf %124, %126 : vector<16x128xf32>
    %128 = arith.addf %119, %127 : vector<16x128xf32>
    %129 = vector.broadcast %13 : f32 to vector<16x128xf32>
    %130 = arith.mulf %129, %109 : vector<16x128xf32>
    %131 = vector.broadcast %14 : f32 to vector<16x128xf32>
    %132 = arith.mulf %131, %108 : vector<16x128xf32>
    %133 = arith.addf %130, %132 : vector<16x128xf32>
    %134 = vector.broadcast %15 : f32 to vector<16x128xf32>
    %135 = arith.mulf %134, %110 : vector<16x128xf32>
    %136 = arith.addf %133, %135 : vector<16x128xf32>
    %c15_i32_47 = arith.constant 15 : i32
    %137 = tpu.dynamic_rotate %136 by %c15_i32_47 dim 0 : vector<16x128xf32>, i32 -> vector<16x128xf32>
    %138 = arith.addf %128, %137 : vector<16x128xf32>
    %cst = arith.constant 0.000000e+00 : f32
    %139 = vector.broadcast %cst : f32 to vector<16x128xf32>
    %140 = arith.select %68, %138, %139 : vector<16x128xi1>, vector<16x128xf32>
    %c1_i32_48 = arith.constant 1 : i32
    %141 = tpu.dynamic_rotate %140 by %c1_i32_48 dim 1 : vector<16x128xf32>, i32 -> vector<16x128xf32>
    %c127_i32_49 = arith.constant 127 : i32
    %142 = tpu.dynamic_rotate %140 by %c127_i32_49 dim 1 : vector<16x128xf32>, i32 -> vector<16x128xf32>
    %143 = vector.broadcast %16 : f32 to vector<16x128xf32>
    %144 = arith.mulf %143, %141 : vector<16x128xf32>
    %145 = vector.broadcast %17 : f32 to vector<16x128xf32>
    %146 = arith.mulf %145, %140 : vector<16x128xf32>
    %147 = arith.addf %144, %146 : vector<16x128xf32>
    %148 = vector.broadcast %18 : f32 to vector<16x128xf32>
    %149 = arith.mulf %148, %142 : vector<16x128xf32>
    %150 = arith.addf %147, %149 : vector<16x128xf32>
    %c1_i32_50 = arith.constant 1 : i32
    %151 = tpu.dynamic_rotate %150 by %c1_i32_50 dim 0 : vector<16x128xf32>, i32 -> vector<16x128xf32>
    %152 = vector.broadcast %19 : f32 to vector<16x128xf32>
    %153 = arith.mulf %152, %141 : vector<16x128xf32>
    %154 = vector.broadcast %20 : f32 to vector<16x128xf32>
    %155 = arith.mulf %154, %140 : vector<16x128xf32>
    %156 = arith.addf %153, %155 : vector<16x128xf32>
    %157 = vector.broadcast %21 : f32 to vector<16x128xf32>
    %158 = arith.mulf %157, %142 : vector<16x128xf32>
    %159 = arith.addf %156, %158 : vector<16x128xf32>
    %160 = arith.addf %151, %159 : vector<16x128xf32>
    %161 = vector.broadcast %22 : f32 to vector<16x128xf32>
    %162 = arith.mulf %161, %141 : vector<16x128xf32>
    %163 = vector.broadcast %23 : f32 to vector<16x128xf32>
    %164 = arith.mulf %163, %140 : vector<16x128xf32>
    %165 = arith.addf %162, %164 : vector<16x128xf32>
    %166 = vector.broadcast %24 : f32 to vector<16x128xf32>
    %167 = arith.mulf %166, %142 : vector<16x128xf32>
    %168 = arith.addf %165, %167 : vector<16x128xf32>
    %c15_i32_51 = arith.constant 15 : i32
    %169 = tpu.dynamic_rotate %168 by %c15_i32_51 dim 0 : vector<16x128xf32>, i32 -> vector<16x128xf32>
    %170 = arith.addf %160, %169 : vector<16x128xf32>
    %c1_i32_52 = arith.constant 1 : i32
    %171 = tpu.dynamic_rotate %108 by %c1_i32_52 dim 0 : vector<16x128xf32>, i32 -> vector<16x128xf32>
    %c15_i32_53 = arith.constant 15 : i32
    %172 = tpu.dynamic_rotate %108 by %c15_i32_53 dim 0 : vector<16x128xf32>, i32 -> vector<16x128xf32>
    %173 = arith.addf %171, %172 : vector<16x128xf32>
    %174 = arith.addf %173, %109 : vector<16x128xf32>
    %175 = arith.addf %174, %110 : vector<16x128xf32>
    %cst_54 = arith.constant 4.000000e+00 : f32
    %176 = vector.broadcast %cst_54 : f32 to vector<16x128xf32>
    %177 = arith.mulf %176, %108 : vector<16x128xf32>
    %178 = arith.subf %175, %177 : vector<16x128xf32>
    %179 = arith.subf %108, %108 : vector<16x128xf32>
    %180 = arith.addf %179, %170 : vector<16x128xf32>
    %181 = vector.broadcast %4 : f32 to vector<16x128xf32>
    %182 = arith.mulf %181, %178 : vector<16x128xf32>
    %183 = arith.addf %180, %182 : vector<16x128xf32>
    %c1_i32_55 = arith.constant 1 : i32
    %c1_i32_56 = arith.constant 1 : i32
    %184 = tpu.dynamic_rotate %183 by %c1_i32_56 dim 1 : vector<16x128xf32>, i32 -> vector<16x128xf32>
    %c127_i32_57 = arith.constant 127 : i32
    %185 = tpu.dynamic_rotate %183 by %c127_i32_57 dim 1 : vector<16x128xf32>, i32 -> vector<16x128xf32>
    %186 = vector.broadcast %7 : f32 to vector<16x128xf32>
    %187 = arith.mulf %186, %184 : vector<16x128xf32>
    %188 = vector.broadcast %8 : f32 to vector<16x128xf32>
    %189 = arith.mulf %188, %183 : vector<16x128xf32>
    %190 = arith.addf %187, %189 : vector<16x128xf32>
    %191 = vector.broadcast %9 : f32 to vector<16x128xf32>
    %192 = arith.mulf %191, %185 : vector<16x128xf32>
    %193 = arith.addf %190, %192 : vector<16x128xf32>
    %c1_i32_58 = arith.constant 1 : i32
    %194 = tpu.dynamic_rotate %193 by %c1_i32_58 dim 0 : vector<16x128xf32>, i32 -> vector<16x128xf32>
    %195 = vector.broadcast %10 : f32 to vector<16x128xf32>
    %196 = arith.mulf %195, %184 : vector<16x128xf32>
    %197 = vector.broadcast %11 : f32 to vector<16x128xf32>
    %198 = arith.mulf %197, %183 : vector<16x128xf32>
    %199 = arith.addf %196, %198 : vector<16x128xf32>
    %200 = vector.broadcast %12 : f32 to vector<16x128xf32>
    %201 = arith.mulf %200, %185 : vector<16x128xf32>
    %202 = arith.addf %199, %201 : vector<16x128xf32>
    %203 = arith.addf %194, %202 : vector<16x128xf32>
    %204 = vector.broadcast %13 : f32 to vector<16x128xf32>
    %205 = arith.mulf %204, %184 : vector<16x128xf32>
    %206 = vector.broadcast %14 : f32 to vector<16x128xf32>
    %207 = arith.mulf %206, %183 : vector<16x128xf32>
    %208 = arith.addf %205, %207 : vector<16x128xf32>
    %209 = vector.broadcast %15 : f32 to vector<16x128xf32>
    %210 = arith.mulf %209, %185 : vector<16x128xf32>
    %211 = arith.addf %208, %210 : vector<16x128xf32>
    %c15_i32_59 = arith.constant 15 : i32
    %212 = tpu.dynamic_rotate %211 by %c15_i32_59 dim 0 : vector<16x128xf32>, i32 -> vector<16x128xf32>
    %213 = arith.addf %203, %212 : vector<16x128xf32>
    %cst_60 = arith.constant 0.000000e+00 : f32
    %214 = vector.broadcast %cst_60 : f32 to vector<16x128xf32>
    %215 = arith.select %68, %213, %214 : vector<16x128xi1>, vector<16x128xf32>
    %c1_i32_61 = arith.constant 1 : i32
    %216 = tpu.dynamic_rotate %215 by %c1_i32_61 dim 1 : vector<16x128xf32>, i32 -> vector<16x128xf32>
    %c127_i32_62 = arith.constant 127 : i32
    %217 = tpu.dynamic_rotate %215 by %c127_i32_62 dim 1 : vector<16x128xf32>, i32 -> vector<16x128xf32>
    %218 = vector.broadcast %16 : f32 to vector<16x128xf32>
    %219 = arith.mulf %218, %216 : vector<16x128xf32>
    %220 = vector.broadcast %17 : f32 to vector<16x128xf32>
    %221 = arith.mulf %220, %215 : vector<16x128xf32>
    %222 = arith.addf %219, %221 : vector<16x128xf32>
    %223 = vector.broadcast %18 : f32 to vector<16x128xf32>
    %224 = arith.mulf %223, %217 : vector<16x128xf32>
    %225 = arith.addf %222, %224 : vector<16x128xf32>
    %c1_i32_63 = arith.constant 1 : i32
    %226 = tpu.dynamic_rotate %225 by %c1_i32_63 dim 0 : vector<16x128xf32>, i32 -> vector<16x128xf32>
    %227 = vector.broadcast %19 : f32 to vector<16x128xf32>
    %228 = arith.mulf %227, %216 : vector<16x128xf32>
    %229 = vector.broadcast %20 : f32 to vector<16x128xf32>
    %230 = arith.mulf %229, %215 : vector<16x128xf32>
    %231 = arith.addf %228, %230 : vector<16x128xf32>
    %232 = vector.broadcast %21 : f32 to vector<16x128xf32>
    %233 = arith.mulf %232, %217 : vector<16x128xf32>
    %234 = arith.addf %231, %233 : vector<16x128xf32>
    %235 = arith.addf %226, %234 : vector<16x128xf32>
    %236 = vector.broadcast %22 : f32 to vector<16x128xf32>
    %237 = arith.mulf %236, %216 : vector<16x128xf32>
    %238 = vector.broadcast %23 : f32 to vector<16x128xf32>
    %239 = arith.mulf %238, %215 : vector<16x128xf32>
    %240 = arith.addf %237, %239 : vector<16x128xf32>
    %241 = vector.broadcast %24 : f32 to vector<16x128xf32>
    %242 = arith.mulf %241, %217 : vector<16x128xf32>
    %243 = arith.addf %240, %242 : vector<16x128xf32>
    %c15_i32_64 = arith.constant 15 : i32
    %244 = tpu.dynamic_rotate %243 by %c15_i32_64 dim 0 : vector<16x128xf32>, i32 -> vector<16x128xf32>
    %245 = arith.addf %235, %244 : vector<16x128xf32>
    %c1_i32_65 = arith.constant 1 : i32
    %246 = tpu.dynamic_rotate %183 by %c1_i32_65 dim 0 : vector<16x128xf32>, i32 -> vector<16x128xf32>
    %c15_i32_66 = arith.constant 15 : i32
    %247 = tpu.dynamic_rotate %183 by %c15_i32_66 dim 0 : vector<16x128xf32>, i32 -> vector<16x128xf32>
    %248 = arith.addf %246, %247 : vector<16x128xf32>
    %249 = arith.addf %248, %184 : vector<16x128xf32>
    %250 = arith.addf %249, %185 : vector<16x128xf32>
    %cst_67 = arith.constant 4.000000e+00 : f32
    %251 = vector.broadcast %cst_67 : f32 to vector<16x128xf32>
    %252 = arith.mulf %251, %183 : vector<16x128xf32>
    %253 = arith.subf %250, %252 : vector<16x128xf32>
    %254 = arith.subf %108, %183 : vector<16x128xf32>
    %255 = arith.addf %254, %245 : vector<16x128xf32>
    %256 = vector.broadcast %4 : f32 to vector<16x128xf32>
    %257 = arith.mulf %256, %253 : vector<16x128xf32>
    %258 = arith.addf %255, %257 : vector<16x128xf32>
    %c2_i32_68 = arith.constant 2 : i32
    %c1_i32_69 = arith.constant 1 : i32
    %259 = tpu.dynamic_rotate %258 by %c1_i32_69 dim 1 : vector<16x128xf32>, i32 -> vector<16x128xf32>
    %c127_i32_70 = arith.constant 127 : i32
    %260 = tpu.dynamic_rotate %258 by %c127_i32_70 dim 1 : vector<16x128xf32>, i32 -> vector<16x128xf32>
    %261 = vector.broadcast %7 : f32 to vector<16x128xf32>
    %262 = arith.mulf %261, %259 : vector<16x128xf32>
    %263 = vector.broadcast %8 : f32 to vector<16x128xf32>
    %264 = arith.mulf %263, %258 : vector<16x128xf32>
    %265 = arith.addf %262, %264 : vector<16x128xf32>
    %266 = vector.broadcast %9 : f32 to vector<16x128xf32>
    %267 = arith.mulf %266, %260 : vector<16x128xf32>
    %268 = arith.addf %265, %267 : vector<16x128xf32>
    %c1_i32_71 = arith.constant 1 : i32
    %269 = tpu.dynamic_rotate %268 by %c1_i32_71 dim 0 : vector<16x128xf32>, i32 -> vector<16x128xf32>
    %270 = vector.broadcast %10 : f32 to vector<16x128xf32>
    %271 = arith.mulf %270, %259 : vector<16x128xf32>
    %272 = vector.broadcast %11 : f32 to vector<16x128xf32>
    %273 = arith.mulf %272, %258 : vector<16x128xf32>
    %274 = arith.addf %271, %273 : vector<16x128xf32>
    %275 = vector.broadcast %12 : f32 to vector<16x128xf32>
    %276 = arith.mulf %275, %260 : vector<16x128xf32>
    %277 = arith.addf %274, %276 : vector<16x128xf32>
    %278 = arith.addf %269, %277 : vector<16x128xf32>
    %279 = vector.broadcast %13 : f32 to vector<16x128xf32>
    %280 = arith.mulf %279, %259 : vector<16x128xf32>
    %281 = vector.broadcast %14 : f32 to vector<16x128xf32>
    %282 = arith.mulf %281, %258 : vector<16x128xf32>
    %283 = arith.addf %280, %282 : vector<16x128xf32>
    %284 = vector.broadcast %15 : f32 to vector<16x128xf32>
    %285 = arith.mulf %284, %260 : vector<16x128xf32>
    %286 = arith.addf %283, %285 : vector<16x128xf32>
    %c15_i32_72 = arith.constant 15 : i32
    %287 = tpu.dynamic_rotate %286 by %c15_i32_72 dim 0 : vector<16x128xf32>, i32 -> vector<16x128xf32>
    %288 = arith.addf %278, %287 : vector<16x128xf32>
    %cst_73 = arith.constant 0.000000e+00 : f32
    %289 = vector.broadcast %cst_73 : f32 to vector<16x128xf32>
    %290 = arith.select %68, %288, %289 : vector<16x128xi1>, vector<16x128xf32>
    %c1_i32_74 = arith.constant 1 : i32
    %291 = tpu.dynamic_rotate %290 by %c1_i32_74 dim 1 : vector<16x128xf32>, i32 -> vector<16x128xf32>
    %c127_i32_75 = arith.constant 127 : i32
    %292 = tpu.dynamic_rotate %290 by %c127_i32_75 dim 1 : vector<16x128xf32>, i32 -> vector<16x128xf32>
    %293 = vector.broadcast %16 : f32 to vector<16x128xf32>
    %294 = arith.mulf %293, %291 : vector<16x128xf32>
    %295 = vector.broadcast %17 : f32 to vector<16x128xf32>
    %296 = arith.mulf %295, %290 : vector<16x128xf32>
    %297 = arith.addf %294, %296 : vector<16x128xf32>
    %298 = vector.broadcast %18 : f32 to vector<16x128xf32>
    %299 = arith.mulf %298, %292 : vector<16x128xf32>
    %300 = arith.addf %297, %299 : vector<16x128xf32>
    %c1_i32_76 = arith.constant 1 : i32
    %301 = tpu.dynamic_rotate %300 by %c1_i32_76 dim 0 : vector<16x128xf32>, i32 -> vector<16x128xf32>
    %302 = vector.broadcast %19 : f32 to vector<16x128xf32>
    %303 = arith.mulf %302, %291 : vector<16x128xf32>
    %304 = vector.broadcast %20 : f32 to vector<16x128xf32>
    %305 = arith.mulf %304, %290 : vector<16x128xf32>
    %306 = arith.addf %303, %305 : vector<16x128xf32>
    %307 = vector.broadcast %21 : f32 to vector<16x128xf32>
    %308 = arith.mulf %307, %292 : vector<16x128xf32>
    %309 = arith.addf %306, %308 : vector<16x128xf32>
    %310 = arith.addf %301, %309 : vector<16x128xf32>
    %311 = vector.broadcast %22 : f32 to vector<16x128xf32>
    %312 = arith.mulf %311, %291 : vector<16x128xf32>
    %313 = vector.broadcast %23 : f32 to vector<16x128xf32>
    %314 = arith.mulf %313, %290 : vector<16x128xf32>
    %315 = arith.addf %312, %314 : vector<16x128xf32>
    %316 = vector.broadcast %24 : f32 to vector<16x128xf32>
    %317 = arith.mulf %316, %292 : vector<16x128xf32>
    %318 = arith.addf %315, %317 : vector<16x128xf32>
    %c15_i32_77 = arith.constant 15 : i32
    %319 = tpu.dynamic_rotate %318 by %c15_i32_77 dim 0 : vector<16x128xf32>, i32 -> vector<16x128xf32>
    %320 = arith.addf %310, %319 : vector<16x128xf32>
    %c1_i32_78 = arith.constant 1 : i32
    %321 = tpu.dynamic_rotate %258 by %c1_i32_78 dim 0 : vector<16x128xf32>, i32 -> vector<16x128xf32>
    %c15_i32_79 = arith.constant 15 : i32
    %322 = tpu.dynamic_rotate %258 by %c15_i32_79 dim 0 : vector<16x128xf32>, i32 -> vector<16x128xf32>
    %323 = arith.addf %321, %322 : vector<16x128xf32>
    %324 = arith.addf %323, %259 : vector<16x128xf32>
    %325 = arith.addf %324, %260 : vector<16x128xf32>
    %cst_80 = arith.constant 4.000000e+00 : f32
    %326 = vector.broadcast %cst_80 : f32 to vector<16x128xf32>
    %327 = arith.mulf %326, %258 : vector<16x128xf32>
    %328 = arith.subf %325, %327 : vector<16x128xf32>
    %329 = arith.subf %108, %258 : vector<16x128xf32>
    %330 = arith.addf %329, %320 : vector<16x128xf32>
    %331 = vector.broadcast %4 : f32 to vector<16x128xf32>
    %332 = arith.mulf %331, %328 : vector<16x128xf32>
    %333 = arith.addf %330, %332 : vector<16x128xf32>
    %c0_81 = arith.constant 0 : index
    %c0_82 = arith.constant 0 : index
    %334 = vector.load %arg7[%c0_81, %c0_82] : memref<16x128xf32, #tpu.memory_space<vmem>>, vector<16x128xf32>
    tpu.vector_store %arg7[%c0_81, %c0_82], %333 {strides = array<i32>} : memref<16x128xf32, #tpu.memory_space<vmem>>, vector<16x128xf32>,
    %c127_i32_83 = arith.constant 127 : i32
    %335 = tpu.dynamic_rotate %333 by %c127_i32_83 dim 1 : vector<16x128xf32>, i32 -> vector<16x128xf32>
    %336 = arith.subf %335, %333 : vector<16x128xf32>
    %c15_i32_84 = arith.constant 15 : i32
    %337 = tpu.dynamic_rotate %333 by %c15_i32_84 dim 0 : vector<16x128xf32>, i32 -> vector<16x128xf32>
    %338 = arith.subf %337, %333 : vector<16x128xf32>
    %339 = arith.addf %336, %27 : vector<16x128xf32>
    %340 = arith.addf %338, %28 : vector<16x128xf32>
    %341 = arith.mulf %339, %339 : vector<16x128xf32>
    %342 = arith.mulf %340, %340 : vector<16x128xf32>
    %343 = arith.addf %341, %342 : vector<16x128xf32>
    %344 = vector.broadcast %6 : f32 to vector<16x128xf32>
    %345 = arith.cmpf ogt, %343, %344 : vector<16x128xf32>
    %346 = math.rsqrt %343 : vector<16x128xf32>
    %347 = vector.broadcast %5 : f32 to vector<16x128xf32>
    %348 = arith.mulf %347, %346 : vector<16x128xf32>
    %cst_85 = arith.constant 1.000000e+00 : f32
    %349 = vector.broadcast %cst_85 : f32 to vector<16x128xf32>
    %350 = arith.subf %349, %348 : vector<16x128xf32>
    %cst_86 = arith.constant 0.000000e+00 : f32
    %351 = vector.broadcast %cst_86 : f32 to vector<16x128xf32>
    %352 = arith.select %345, %350, %351 : vector<16x128xi1>, vector<16x128xf32>
    %353 = arith.mulf %352, %339 : vector<16x128xf32>
    %c0_87 = arith.constant 0 : index
    %c0_88 = arith.constant 0 : index
    %354 = vector.load %arg8[%c0_87, %c0_88] : memref<16x128xf32, #tpu.memory_space<vmem>>, vector<16x128xf32>
    tpu.vector_store %arg8[%c0_87, %c0_88], %353 {strides = array<i32>} : memref<16x128xf32, #tpu.memory_space<vmem>>, vector<16x128xf32>,
    %355 = arith.addf %27, %336 : vector<16x128xf32>
    %356 = arith.subf %355, %353 : vector<16x128xf32>
    %c0_89 = arith.constant 0 : index
    %c0_90 = arith.constant 0 : index
    %357 = vector.load %arg10[%c0_89, %c0_90] : memref<16x128xf32, #tpu.memory_space<vmem>>, vector<16x128xf32>
    tpu.vector_store %arg10[%c0_89, %c0_90], %356 {strides = array<i32>} : memref<16x128xf32, #tpu.memory_space<vmem>>, vector<16x128xf32>,
    %358 = arith.mulf %352, %340 : vector<16x128xf32>
    %c0_91 = arith.constant 0 : index
    %c0_92 = arith.constant 0 : index
    %359 = vector.load %arg9[%c0_91, %c0_92] : memref<16x128xf32, #tpu.memory_space<vmem>>, vector<16x128xf32>
    tpu.vector_store %arg9[%c0_91, %c0_92], %358 {strides = array<i32>} : memref<16x128xf32, #tpu.memory_space<vmem>>, vector<16x128xf32>,
    %360 = arith.addf %28, %338 : vector<16x128xf32>
    %361 = arith.subf %360, %358 : vector<16x128xf32>
    %c0_93 = arith.constant 0 : index
    %c0_94 = arith.constant 0 : index
    %362 = vector.load %arg11[%c0_93, %c0_94] : memref<16x128xf32, #tpu.memory_space<vmem>>, vector<16x128xf32>
    tpu.vector_store %arg11[%c0_93, %c0_94], %361 {strides = array<i32>} : memref<16x128xf32, #tpu.memory_space<vmem>>, vector<16x128xf32>,
    return
  }
}

</mosaic_0001>

<llo_original>
// kernel: iteration_forward.1
$region0: #{iteration_forward.1}
  #allocation0 [shape = 'u32[]', space=smem, size = 0x4, offset = 0x4, fixed_abs, tag = 'smem constant byte address 0x4 - core index']
  #allocation1 [shape = 'u32[144,128]{1,0:T(1,128)}', space=vmem, size = 0x12000, scoped, tag = 'internal scratch']
  %s0 = inlined_call_operand.vmem [shape: f32[4], index: 0, kind: input, shape index: {}]
  %s1 = inlined_call_operand.vmem [shape: f32[3,3], index: 1, kind: input, shape index: {}]
  %s2 = inlined_call_operand.vmem [shape: f32[16,128], index: 2, kind: input, shape index: {}]
  %s3 = inlined_call_operand.hbm [shape: f32[16,128], index: 3, kind: input, shape index: {}, may-alias: {3,8}]
  %s4 = inlined_call_operand.hbm [shape: f32[16,128], index: 4, kind: input, shape index: {}, may-alias: {4,9}]
  %s5 = inlined_call_operand.hbm [shape: f32[16,128], index: 5, kind: input, shape index: {}, may-alias: {5,10}]
  %s6 = inlined_call_operand.hbm [shape: f32[16,128], index: 6, kind: input, shape index: {}, may-alias: {6,11}]
  %s7 = inlined_call_operand.hbm [shape: f32[16,128], index: 7, kind: output, shape index: {0}]
  %s8 = inlined_call_operand.hbm [shape: f32[16,128], index: 8, kind: output, shape index: {1}, may-alias: {3,8}]
  %s9 = inlined_call_operand.hbm [shape: f32[16,128], index: 9, kind: output, shape index: {2}, may-alias: {4,9}]
  %s10 = inlined_call_operand.hbm [shape: f32[16,128], index: 10, kind: output, shape index: {3}, may-alias: {5,10}]
  %s11 = inlined_call_operand.hbm [shape: f32[16,128], index: 11, kind: output, shape index: {4}, may-alias: {6,11}]
  %12 = xla_tuple %s7, %s8, %s9, %s10, %s11
  %s13 = sld [smem:[#allocation0]]
  $region94: #{iteration_forward.1} parent=0
    _
  %s15 = ssub.s32 1, %s13
  %s16 = scalar_select 0, %s15, %s13
  $region1: #{iteration_forward.1} parent=0
    #allocation2 [shape = 'u8[512]{0}', space=smem, size = 0x200, scoped, tag = 'input window, operand 0, single buffered']
    #allocation3 [shape = 's32[1]{0}', space=sflag, size = 0x4, scoped, tag = 'scoped memory for iteration_forward.1']
    #allocation4 [shape = 's32[1]{0}', space=sflag, size = 0x4, scoped, tag = 'scoped memory for iteration_forward.1']
    #allocation5 [shape = 's32[1]{0}', space=sflag, size = 0x4, scoped, tag = 'scoped memory for iteration_forward.1']
    #allocation6 [shape = 'u8[2048]{0}', space=smem, size = 0x800, scoped, tag = 'input window, operand 1, single buffered']
    #allocation7 [shape = 's32[1]{0}', space=sflag, size = 0x4, scoped, tag = 'scoped memory for iteration_forward.1']
    #allocation8 [shape = 'u8[8192]{0}', space=vmem, size = 0x2000, scoped, tag = 'input window, operand 3, single buffered']
    #allocation9 [shape = 'u8[8192]{0}', space=vmem, size = 0x2000, scoped, tag = 'input window, operand 4, single buffered']
    #allocation10 [shape = 's32[1]{0}', space=sflag, size = 0x4, scoped, tag = 'scoped memory for iteration_forward.1']
    #allocation11 [shape = 'u8[8192]{0}', space=vmem, size = 0x2000, scoped, tag = 'input window, operand 5, single buffered']
    #allocation12 [shape = 'u8[8192]{0}', space=vmem, size = 0x2000, scoped, tag = 'input window, operand 6, single buffered']
    #allocation13 [shape = 's32[1]{0}', space=sflag, size = 0x4, scoped, tag = 'scoped memory for iteration_forward.1']
    #allocation14 [shape = 'u8[8192]{0}', space=vmem, size = 0x2000, scoped, tag = 'output window, operand 0, single buffered']
    #allocation15 [shape = 'u8[8192]{0}', space=vmem, size = 0x2000, scoped, tag = 'output window, operand 1, single buffered']
    #allocation16 [shape = 's32[1]{0}', space=sflag, size = 0x4, scoped, tag = 'scoped memory for iteration_forward.1']
    #allocation17 [shape = 'u8[8192]{0}', space=vmem, size = 0x2000, scoped, tag = 'output window, operand 2, single buffered']
    #allocation18 [shape = 'u8[8192]{0}', space=vmem, size = 0x2000, scoped, tag = 'output window, operand 3, single buffered']
    #allocation19 [shape = 's32[1]{0}', space=sflag, size = 0x4, scoped, tag = 'scoped memory for iteration_forward.1']
    #allocation20 [shape = 'u8[8192]{0}', space=vmem, size = 0x2000, scoped, tag = 'output window, operand 4, single buffered']
    %17 = vsyncpa [#allocation5], 0
    %18 = vsyncpa [#allocation7], 0
    %19 = vsyncpa [#allocation3], 0
    %20 = vsyncpa [#allocation10], 0
    %21 = vsyncpa [#allocation13], 0
    %22 = vsyncpa [#allocation4], 0
    %23 = vsyncpa [#allocation16], 0
    %24 = vsyncpa [#allocation19], 0
    // Predicated region
    $region2: #{iteration_forward.1} parent=1 // pred_check
      _
    $region3: #{iteration_forward.1} parent=1 // pred_check_branch
      %26 = sbr.rel (0) target = $region5
    $region4: #{iteration_forward.1} parent=1 // pred_region
      %s28 = ssub.s32 16, 16
      %29 = vsyncadd [#allocation5], %s28
      %s31 = sshll.u32 %s0, 4
      %s32 = int_to_ptr.vmem [resolvable:$true] %s31
      %34 = dma.vmem_to_smem %s32, 16, [#allocation2], [#allocation5]
    $region5: #{iteration_forward.1} parent=1 // pred_fallthru
      _
    // Predicated region
    $region6: #{iteration_forward.1} parent=1 // pred_check
      _
    $region7: #{iteration_forward.1} parent=1 // pred_check_branch
      %36 = sbr.rel (0) target = $region9
    $region8: #{iteration_forward.1} parent=1 // pred_region
      %s38 = ssub.s32 64, 64
      %39 = vsyncadd [#allocation7], %s38
      %s41 = sshll.u32 %s1, 4
      %s42 = int_to_ptr.vmem [resolvable:$true] %s41
      %44 = dma.vmem_to_smem %s42, 64, [#allocation6], [#allocation7]
    $region9: #{iteration_forward.1} parent=1 // pred_fallthru
      _
    // Predicated region
    $region10: #{iteration_forward.1} parent=1 // pred_check
      _
    $region11: #{iteration_forward.1} parent=1 // pred_check_branch
      %46 = sbr.rel (0) target = $region13
    $region12: #{iteration_forward.1} parent=1 // pred_region
      _
    $region13: #{iteration_forward.1} parent=1 // pred_fallthru
      _
    // Predicated region
    $region14: #{iteration_forward.1} parent=1 // pred_check
      _
    $region15: #{iteration_forward.1} parent=1 // pred_check_branch
      %48 = sbr.rel (0) target = $region17
    $region16: #{iteration_forward.1} parent=1 // pred_region
      %s50 = ssub.s32 256, 256
      %51 = vsyncadd [#allocation3], %s50
      %s52 = sshll.u32 [#allocation8], 4
      %s53 = int_to_ptr.vmem [resolvable:$true] %s52
      %58 = dma.hbm_to_vmem [thread:$0]  %s3, 256, %s53, [#allocation3], 128, 128, 8
    $region17: #{iteration_forward.1} parent=1 // pred_fallthru
      _
    // Predicated region
    $region18: #{iteration_forward.1} parent=1 // pred_check
      _
    $region19: #{iteration_forward.1} parent=1 // pred_check_branch
      %60 = sbr.rel (0) target = $region21
    $region20: #{iteration_forward.1} parent=1 // pred_region
      %s62 = ssub.s32 256, 256
      %63 = vsyncadd [#allocation10], %s62
      %s64 = sshll.u32 [#allocation9], 4
      %s65 = int_to_ptr.vmem [resolvable:$true] %s64
      %70 = dma.hbm_to_vmem [thread:$0]  %s4, 256, %s65, [#allocation10], 128, 128, 8
    $region21: #{iteration_forward.1} parent=1 // pred_fallthru
      _
    // Predicated region
    $region22: #{iteration_forward.1} parent=1 // pred_check
      _
    $region23: #{iteration_forward.1} parent=1 // pred_check_branch
      %72 = sbr.rel (0) target = $region25
    $region24: #{iteration_forward.1} parent=1 // pred_region
      %s74 = ssub.s32 256, 256
      %75 = vsyncadd [#allocation10], %s74
      %s76 = sshll.u32 [#allocation11], 4
      %s77 = int_to_ptr.vmem [resolvable:$true] %s76
      %82 = dma.hbm_to_vmem [thread:$0]  %s5, 256, %s77, [#allocation10], 128, 128, 8
    $region25: #{iteration_forward.1} parent=1 // pred_fallthru
      _
    // Predicated region
    $region26: #{iteration_forward.1} parent=1 // pred_check
      _
    $region27: #{iteration_forward.1} parent=1 // pred_check_branch
      %84 = sbr.rel (0) target = $region29
    $region28: #{iteration_forward.1} parent=1 // pred_region
      %s86 = ssub.s32 256, 256
      %87 = vsyncadd [#allocation13], %s86
      %s88 = sshll.u32 [#allocation12], 4
      %s89 = int_to_ptr.vmem [resolvable:$true] %s88
      %94 = dma.hbm_to_vmem [thread:$0]  %s6, 256, %s89, [#allocation13], 128, 128, 8
    $region29: #{iteration_forward.1} parent=1 // pred_fallthru
      _
    // Predicated region
    $region30: #{iteration_forward.1} parent=1 // pred_check
      _
    $region31: #{iteration_forward.1} parent=1 // pred_check_branch
      %96 = sbr.rel (0) target = $region33
    $region32: #{iteration_forward.1} parent=1 // pred_region
      %97 = dma.done [#allocation5], 16
    $region33: #{iteration_forward.1} parent=1 // pred_fallthru
      _
    // Predicated region
    $region34: #{iteration_forward.1} parent=1 // pred_check
      _
    $region35: #{iteration_forward.1} parent=1 // pred_check_branch
      %99 = sbr.rel (0) target = $region37
    $region36: #{iteration_forward.1} parent=1 // pred_region
      %100 = dma.done [#allocation7], 64
    $region37: #{iteration_forward.1} parent=1 // pred_fallthru
      _
    // Predicated region
    $region38: #{iteration_forward.1} parent=1 // pred_check
      _
    $region39: #{iteration_forward.1} parent=1 // pred_check_branch
      %102 = sbr.rel (0) target = $region41
    $region40: #{iteration_forward.1} parent=1 // pred_region
      %103 = dma.done [#allocation3], 256
    $region41: #{iteration_forward.1} parent=1 // pred_fallthru
      _
    // Predicated region
    $region42: #{iteration_forward.1} parent=1 // pred_check
      _
    $region43: #{iteration_forward.1} parent=1 // pred_check_branch
      %105 = sbr.rel (0) target = $region45
    $region44: #{iteration_forward.1} parent=1 // pred_region
      %106 = dma.done [#allocation10], 256
    $region45: #{iteration_forward.1} parent=1 // pred_fallthru
      _
    // Predicated region
    $region46: #{iteration_forward.1} parent=1 // pred_check
      _
    $region47: #{iteration_forward.1} parent=1 // pred_check_branch
      %108 = sbr.rel (0) target = $region49
    $region48: #{iteration_forward.1} parent=1 // pred_region
      %109 = dma.done [#allocation10], 256
    $region49: #{iteration_forward.1} parent=1 // pred_fallthru
      _
    // Predicated region
    $region50: #{iteration_forward.1} parent=1 // pred_check
      _
    $region51: #{iteration_forward.1} parent=1 // pred_check_branch
      %111 = sbr.rel (0) target = $region53
    $region52: #{iteration_forward.1} parent=1 // pred_region
      %112 = dma.done [#allocation13], 256
    $region53: #{iteration_forward.1} parent=1 // pred_fallthru
      _
    %113 = sfence
    %s114 = sld [smem:[#allocation2]]
    %s115 = sld [smem:[#allocation2 + $0x1]]
    %s116 = sld [smem:[#allocation2 + $0x2]]
    %s117 = sld [smem:[#allocation2 + $0x3]]
    %s118 = sadd.f32 %s115, %s117
    %v119 = vstv %s117
    %v120 = vrcp.pop %v119
    %s121 = vtos %v120
    %s122 = smul.f32 %s116, %s121
    %s123 = smul.f32 %s122, %s122
    %s124 = sld [smem:[#allocation6]]
    %s125 = sld [smem:[#allocation6 + $0x1]]
    %s126 = sld [smem:[#allocation6 + $0x2]]
    %s127 = sld [smem:[#allocation6 + $0x80]]
    %s128 = sld [smem:[#allocation6 + $0x81]]
    %s129 = sld [smem:[#allocation6 + $0x82]]
    %s130 = sld [smem:[#allocation6 + $0x100]]
    %s131 = sld [smem:[#allocation6 + $0x101]]
    %s132 = sld [smem:[#allocation6 + $0x102]]
    %s133 = smul.f32 %s114, %s130
    %s134 = smul.f32 %s114, %s131
    %s135 = smul.f32 %s114, %s132
    %s136 = smul.f32 %s114, %s127
    %s137 = smul.f32 %s114, %s128
    %s138 = smul.f32 %s114, %s129
    %s139 = smul.f32 %s114, %s124
    %s140 = smul.f32 %s114, %s125
    %s141 = smul.f32 %s114, %s126
    %v142 = vld [vmem:[#allocation8] sm:$0xff]
    %v143 = vld [vmem:[#allocation8 + $0x8] sm:$0xff]
    %v144 = vld [vmem:[#allocation9] sm:$0xff]
    %v145 = vld [vmem:[#allocation9 + $0x8] sm:$0xff]
    %v146 = vld [vmem:[#allocation11] sm:$0xff]
    %v147 = vld [vmem:[#allocation11 + $0x8] sm:$0xff]
    %v148 = vld [vmem:[#allocation12] sm:$0xff]
    %v149 = vld [vmem:[#allocation12 + $0x8] sm:$0xff]
    %v150 = vld [vmem:[%s2] sm:$0xff]
    %v151 = vld [vmem:[%s2 + $0x8] sm:$0xff]
    %v152 = vlaneseq
    %v153 = vshrl.u32 %v152, 7
    %v154 = vadd.s32 %v153, 8
    %v155 = vlaneseq
    %v156 = vand.u32 %v155, 127
    %vm157 = vcmp.lt.s32.totalorder %v153, 0
    %v158 = vsub.s32 0, %v153
    %v159 = vsel %vm157, %v158, %v153
    %v160 = vshrl.u32 %v159, 1
    %v161 = vand.u32 %v159, 1
    %v162 = vsub.s32 0, %v161
    %v163 = vsel %vm157, %v162, %v161
    %vm164 = vcmp.lt.s32.totalorder %v154, 0
    %v165 = vsub.s32 0, %v154
    %v166 = vsel %vm164, %v165, %v154
    %v167 = vshrl.u32 %v166, 1
    %v168 = vand.u32 %v166, 1
    %v169 = vsub.s32 0, %v168
    %v170 = vsel %vm164, %v169, %v168
    %vm171 = vcmp.ne.s32.totalorder %v163, 0
    %vm172 = vcmp.ne.s32.totalorder %v170, 0
    %vm173 = vcmp.lt.s32.totalorder %v163, 0
    %vm174 = vcmp.lt.s32.totalorder %v170, 0
    %vm175 = vmand %vm173, %vm171
    %vm176 = vmand %vm174, %vm172
    %v177 = vadd.s32 %v163, 2
    %v178 = vadd.s32 %v170, 2
    %v179 = vsel %vm175, %v177, %v163
    %v180 = vsel %vm176, %v178, %v170
    %vm181 = vcmp.eq.s32.totalorder %v179, 0
    %vm182 = vcmp.eq.s32.totalorder %v180, 0
    %vm183 = vcmp.lt.s32.totalorder %v156, 0
    %v184 = vsub.s32 0, %v156
    %v185 = vsel %vm183, %v184, %v156
    %v186 = vshrl.u32 %v185, 1
    %v187 = vand.u32 %v185, 1
    %v188 = vsub.s32 0, %v187
    %v189 = vsel %vm183, %v188, %v187
    %vm190 = vcmp.ne.s32.totalorder %v189, 0
    %vm191 = vcmp.lt.s32.totalorder %v189, 0
    %vm192 = vmand %vm191, %vm190
    %v193 = vadd.s32 %v189, 2
    %v194 = vsel %vm192, %v193, %v189
    %vm195 = vcmp.eq.s32.totalorder %v194, 0
    %vm196 = vmand %vm181, %vm195
    %vm197 = vmand %vm182, %vm195
    %v198 = vsub.f32 %v142, %v146
    %v199 = vsub.f32 %v143, %v147
    %200 = vrot.lane.b32.xlu0 %v198, 1
    %v201 = vpop.permute.xlu0 %200
    %202 = vrot.lane.b32.xlu0 %v199, 1
    %v203 = vpop.permute.xlu0 %202
    %v204 = vsub.f32 %v201, %v198
    %v205 = vsub.f32 %v203, %v199
    %v206 = vsub.f32 %v144, %v148
    %v207 = vsub.f32 %v145, %v149
    %v208 = vrot.slane %v206, 7
    %v209 = vrot.slane %v207, 7
    %vm210 = vcmp.lt.s32.totalorder %v153, 1
    %v211 = vsel %vm210, %v208, %v209
    %v212 = vsel %vm210, %v209, %v208
    %v213 = vsub.f32 %v212, %v206
    %v214 = vsub.f32 %v211, %v207
    %v215 = vadd.f32 %v204, %v213
    %v216 = vadd.f32 %v205, %v214
    %v217 = vstv %s117
    %v218 = vmul.f32 %v217, %v215
    %v219 = vmul.f32 %v217, %v216
    %220 = vrot.lane.b32.xlu0 %v150, 1
    %v221 = vpop.permute.xlu0 %220
    %222 = vrot.lane.b32.xlu0 %v151, 1
    %v223 = vpop.permute.xlu0 %222
    %224 = vrot.lane.b32.xlu0 %v150, 127
    %v225 = vpop.permute.xlu0 %224
    %226 = vrot.lane.b32.xlu0 %v151, 127
    %v227 = vpop.permute.xlu0 %226
    %v228 = vstv %s133
    %v229 = vmul.f32 %v228, %v221
    %v230 = vmul.f32 %v228, %v223
    %v231 = vstv %s134
    %v232 = vmul.f32 %v231, %v150
    %v233 = vmul.f32 %v231, %v151
    %v234 = vadd.f32 %v229, %v232
    %v235 = vadd.f32 %v230, %v233
    %v236 = vstv %s135
    %v237 = vmul.f32 %v236, %v225
    %v238 = vmul.f32 %v236, %v227
    %v239 = vadd.f32 %v234, %v237
    %v240 = vadd.f32 %v235, %v238
    %v241 = vrot.slane %v239, 7
    %v242 = vrot.slane %v240, 7
    %v243 = vsel %vm210, %v241, %v242
    %v244 = vsel %vm210, %v242, %v241
    %v245 = vstv %s136
    %v246 = vmul.f32 %v245, %v221
    %v247 = vmul.f32 %v245, %v223
    %v248 = vstv %s137
    %v249 = vmul.f32 %v248, %v150
    %v250 = vmul.f32 %v248, %v151
    %v251 = vadd.f32 %v246, %v249
    %v252 = vadd.f32 %v247, %v250
    %v253 = vstv %s138
    %v254 = vmul.f32 %v253, %v225
    %v255 = vmul.f32 %v253, %v227
    %v256 = vadd.f32 %v251, %v254
    %v257 = vadd.f32 %v252, %v255
    %v258 = vadd.f32 %v244, %v256
    %v259 = vadd.f32 %v243, %v257
    %v260 = vstv %s139
    %v261 = vmul.f32 %v260, %v221
    %v262 = vmul.f32 %v260, %v223
    %v263 = vstv %s140
    %v264 = vmul.f32 %v263, %v150
    %v265 = vmul.f32 %v263, %v151
    %v266 = vadd.f32 %v261, %v264
    %v267 = vadd.f32 %v262, %v265
    %v268 = vstv %s141
    %v269 = vmul.f32 %v268, %v225
    %v270 = vmul.f32 %v268, %v227
    %v271 = vadd.f32 %v266, %v269
    %v272 = vadd.f32 %v267, %v270
    %v273 = vrot.slane %v271, 1
    %v274 = vrot.slane %v272, 1
    %vm275 = vcmp.lt.s32.totalorder %v153, 7
    %v276 = vsel %vm275, %v273, %v274
    %v277 = vsel %vm275, %v274, %v273
    %v278 = vadd.f32 %v258, %v276
    %v279 = vadd.f32 %v259, %v277
    %v280 = vadd.f32 %v218, %v278
    %v281 = vadd.f32 %v219, %v279
    %282 = vrot.lane.b32.xlu0 %v280, 1
    %v283 = vpop.permute.xlu0 %282
    %284 = vrot.lane.b32.xlu0 %v281, 1
    %v285 = vpop.permute.xlu0 %284
    %286 = vrot.lane.b32.xlu0 %v280, 127
    %v287 = vpop.permute.xlu0 %286
    %288 = vrot.lane.b32.xlu0 %v281, 127
    %v289 = vpop.permute.xlu0 %288
    %v290 = vstv %s124
    %v291 = vmul.f32 %v290, %v283
    %v292 = vmul.f32 %v290, %v285
    %v293 = vstv %s125
    %v294 = vmul.f32 %v293, %v280
    %v295 = vmul.f32 %v293, %v281
    %v296 = vadd.f32 %v291, %v294
    %v297 = vadd.f32 %v292, %v295
    %v298 = vstv %s126
    %v299 = vmul.f32 %v298, %v287
    %v300 = vmul.f32 %v298, %v289
    %v301 = vadd.f32 %v296, %v299
    %v302 = vadd.f32 %v297, %v300
    %v303 = vrot.slane %v301, 7
    %v304 = vrot.slane %v302, 7
    %v305 = vsel %vm210, %v303, %v304
    %v306 = vsel %vm210, %v304, %v303
    %v307 = vstv %s127
    %v308 = vmul.f32 %v307, %v283
    %v309 = vmul.f32 %v307, %v285
    %v310 = vstv %s128
    %v311 = vmul.f32 %v310, %v280
    %v312 = vmul.f32 %v310, %v281
    %v313 = vadd.f32 %v308, %v311
    %v314 = vadd.f32 %v309, %v312
    %v315 = vstv %s129
    %v316 = vmul.f32 %v315, %v287
    %v317 = vmul.f32 %v315, %v289
    %v318 = vadd.f32 %v313, %v316
    %v319 = vadd.f32 %v314, %v317
    %v320 = vadd.f32 %v306, %v318
    %v321 = vadd.f32 %v305, %v319
    %v322 = vstv %s130
    %v323 = vmul.f32 %v322, %v283
    %v324 = vmul.f32 %v322, %v285
    %v325 = vstv %s131
    %v326 = vmul.f32 %v325, %v280
    %v327 = vmul.f32 %v325, %v281
    %v328 = vadd.f32 %v323, %v326
    %v329 = vadd.f32 %v324, %v327
    %v330 = vstv %s132
    %v331 = vmul.f32 %v330, %v287
    %v332 = vmul.f32 %v330, %v289
    %v333 = vadd.f32 %v328, %v331
    %v334 = vadd.f32 %v329, %v332
    %v335 = vrot.slane %v333, 1
    %v336 = vrot.slane %v334, 1
    %v337 = vsel %vm275, %v335, %v336
    %v338 = vsel %vm275, %v336, %v335
    %v339 = vadd.f32 %v320, %v337
    %v340 = vadd.f32 %v321, %v338
    %v341 = vsel %vm196, %v339, 0.0
    %v342 = vsel %vm197, %v340, 0.0
    %343 = vrot.lane.b32.xlu0 %v341, 1
    %v344 = vpop.permute.xlu0 %343
    %345 = vrot.lane.b32.xlu0 %v342, 1
    %v346 = vpop.permute.xlu0 %345
    %347 = vrot.lane.b32.xlu0 %v341, 127
    %v348 = vpop.permute.xlu0 %347
    %349 = vrot.lane.b32.xlu0 %v342, 127
    %v350 = vpop.permute.xlu0 %349
    %v351 = vmul.f32 %v228, %v344
    %v352 = vmul.f32 %v228, %v346
    %v353 = vmul.f32 %v231, %v341
    %v354 = vmul.f32 %v231, %v342
    %v355 = vadd.f32 %v351, %v353
    %v356 = vadd.f32 %v352, %v354
    %v357 = vmul.f32 %v236, %v348
    %v358 = vmul.f32 %v236, %v350
    %v359 = vadd.f32 %v355, %v357
    %v360 = vadd.f32 %v356, %v358
    %v361 = vrot.slane %v359, 7
    %v362 = vrot.slane %v360, 7
    %v363 = vsel %vm210, %v361, %v362
    %v364 = vsel %vm210, %v362, %v361
    %v365 = vmul.f32 %v245, %v344
    %v366 = vmul.f32 %v245, %v346
    %v367 = vmul.f32 %v248, %v341
    %v368 = vmul.f32 %v248, %v342
    %v369 = vadd.f32 %v365, %v367
    %v370 = vadd.f32 %v366, %v368
    %v371 = vmul.f32 %v253, %v348
    %v372 = vmul.f32 %v253, %v350
    %v373 = vadd.f32 %v369, %v371
    %v374 = vadd.f32 %v370, %v372
    %v375 = vadd.f32 %v364, %v373
    %v376 = vadd.f32 %v363, %v374
    %v377 = vmul.f32 %v260, %v344
    %v378 = vmul.f32 %v260, %v346
    %v379 = vmul.f32 %v263, %v341
    %v380 = vmul.f32 %v263, %v342
    %v381 = vadd.f32 %v377, %v379
    %v382 = vadd.f32 %v378, %v380
    %v383 = vmul.f32 %v268, %v348
    %v384 = vmul.f32 %v268, %v350
    %v385 = vadd.f32 %v381, %v383
    %v386 = vadd.f32 %v382, %v384
    %v387 = vrot.slane %v385, 1
    %v388 = vrot.slane %v386, 1
    %v389 = vsel %vm275, %v387, %v388
    %v390 = vsel %vm275, %v388, %v387
    %v391 = vadd.f32 %v375, %v389
    %v392 = vadd.f32 %v376, %v390
    %v393 = vrot.slane %v280, 7
    %v394 = vrot.slane %v281, 7
    %v395 = vsel %vm210, %v393, %v394
    %v396 = vsel %vm210, %v394, %v393
    %v397 = vrot.slane %v280, 1
    %v398 = vrot.slane %v281, 1
    %v399 = vsel %vm275, %v397, %v398
    %v400 = vsel %vm275, %v398, %v397
    %v401 = vadd.f32 %v396, %v399
    %v402 = vadd.f32 %v395, %v400
    %v403 = vadd.f32 %v401, %v283
    %v404 = vadd.f32 %v402, %v285
    %v405 = vadd.f32 %v403, %v287
    %v406 = vadd.f32 %v404, %v289
    %v407 = vmul.f32 %v280, 4.0
    %v408 = vmul.f32 %v281, 4.0
    %v409 = vsub.f32 %v405, %v407
    %v410 = vsub.f32 %v406, %v408
    %v411 = vsub.f32 %v280, %v280
    %v412 = vsub.f32 %v281, %v281
    %v413 = vadd.f32 %v411, %v391
    %v414 = vadd.f32 %v412, %v392
    %v415 = vstv %s118
    %v416 = vmul.f32 %v415, %v409
    %v417 = vmul.f32 %v415, %v410
    %v418 = vadd.f32 %v413, %v416
    %v419 = vadd.f32 %v414, %v417
    %420 = vrot.lane.b32.xlu0 %v418, 1
    %v421 = vpop.permute.xlu0 %420
    %422 = vrot.lane.b32.xlu0 %v419, 1
    %v423 = vpop.permute.xlu0 %422
    %424 = vrot.lane.b32.xlu0 %v418, 127
    %v425 = vpop.permute.xlu0 %424
    %426 = vrot.lane.b32.xlu0 %v419, 127
    %v427 = vpop.permute.xlu0 %426
    %v428 = vmul.f32 %v290, %v421
    %v429 = vmul.f32 %v290, %v423
    %v430 = vmul.f32 %v293, %v418
    %v431 = vmul.f32 %v293, %v419
    %v432 = vadd.f32 %v428, %v430
    %v433 = vadd.f32 %v429, %v431
    %v434 = vmul.f32 %v298, %v425
    %v435 = vmul.f32 %v298, %v427
    %v436 = vadd.f32 %v432, %v434
    %v437 = vadd.f32 %v433, %v435
    %v438 = vrot.slane %v436, 7
    %v439 = vrot.slane %v437, 7
    %v440 = vsel %vm210, %v438, %v439
    %v441 = vsel %vm210, %v439, %v438
    %v442 = vmul.f32 %v307, %v421
    %v443 = vmul.f32 %v307, %v423
    %v444 = vmul.f32 %v310, %v418
    %v445 = vmul.f32 %v310, %v419
    %v446 = vadd.f32 %v442, %v444
    %v447 = vadd.f32 %v443, %v445
    %v448 = vmul.f32 %v315, %v425
    %v449 = vmul.f32 %v315, %v427
    %v450 = vadd.f32 %v446, %v448
    %v451 = vadd.f32 %v447, %v449
    %v452 = vadd.f32 %v441, %v450
    %v453 = vadd.f32 %v440, %v451
    %v454 = vmul.f32 %v322, %v421
    %v455 = vmul.f32 %v322, %v423
    %v456 = vmul.f32 %v325, %v418
    %v457 = vmul.f32 %v325, %v419
    %v458 = vadd.f32 %v454, %v456
    %v459 = vadd.f32 %v455, %v457
    %v460 = vmul.f32 %v330, %v425
    %v461 = vmul.f32 %v330, %v427
    %v462 = vadd.f32 %v458, %v460
    %v463 = vadd.f32 %v459, %v461
    %v464 = vrot.slane %v462, 1
    %v465 = vrot.slane %v463, 1
    %v466 = vsel %vm275, %v464, %v465
    %v467 = vsel %vm275, %v465, %v464
    %v468 = vadd.f32 %v452, %v466
    %v469 = vadd.f32 %v453, %v467
    %v470 = vsel %vm196, %v468, 0.0
    %v471 = vsel %vm197, %v469, 0.0
    %472 = vrot.lane.b32.xlu0 %v470, 1
    %v473 = vpop.permute.xlu0 %472
    %474 = vrot.lane.b32.xlu0 %v471, 1
    %v475 = vpop.permute.xlu0 %474
    %476 = vrot.lane.b32.xlu0 %v470, 127
    %v477 = vpop.permute.xlu0 %476
    %478 = vrot.lane.b32.xlu0 %v471, 127
    %v479 = vpop.permute.xlu0 %478
    %v480 = vmul.f32 %v228, %v473
    %v481 = vmul.f32 %v228, %v475
    %v482 = vmul.f32 %v231, %v470
    %v483 = vmul.f32 %v231, %v471
    %v484 = vadd.f32 %v480, %v482
    %v485 = vadd.f32 %v481, %v483
    %v486 = vmul.f32 %v236, %v477
    %v487 = vmul.f32 %v236, %v479
    %v488 = vadd.f32 %v484, %v486
    %v489 = vadd.f32 %v485, %v487
    %v490 = vrot.slane %v488, 7
    %v491 = vrot.slane %v489, 7
    %v492 = vsel %vm210, %v490, %v491
    %v493 = vsel %vm210, %v491, %v490
    %v494 = vmul.f32 %v245, %v473
    %v495 = vmul.f32 %v245, %v475
    %v496 = vmul.f32 %v248, %v470
    %v497 = vmul.f32 %v248, %v471
    %v498 = vadd.f32 %v494, %v496
    %v499 = vadd.f32 %v495, %v497
    %v500 = vmul.f32 %v253, %v477
    %v501 = vmul.f32 %v253, %v479
    %v502 = vadd.f32 %v498, %v500
    %v503 = vadd.f32 %v499, %v501
    %v504 = vadd.f32 %v493, %v502
    %v505 = vadd.f32 %v492, %v503
    %v506 = vmul.f32 %v260, %v473
    %v507 = vmul.f32 %v260, %v475
    %v508 = vmul.f32 %v263, %v470
    %v509 = vmul.f32 %v263, %v471
    %v510 = vadd.f32 %v506, %v508
    %v511 = vadd.f32 %v507, %v509
    %v512 = vmul.f32 %v268, %v477
    %v513 = vmul.f32 %v268, %v479
    %v514 = vadd.f32 %v510, %v512
    %v515 = vadd.f32 %v511, %v513
    %v516 = vrot.slane %v514, 1
    %v517 = vrot.slane %v515, 1
    %v518 = vsel %vm275, %v516, %v517
    %v519 = vsel %vm275, %v517, %v516
    %v520 = vadd.f32 %v504, %v518
    %v521 = vadd.f32 %v505, %v519
    %v522 = vrot.slane %v418, 7
    %v523 = vrot.slane %v419, 7
    %v524 = vsel %vm210, %v522, %v523
    %v525 = vsel %vm210, %v523, %v522
    %v526 = vrot.slane %v418, 1
    %v527 = vrot.slane %v419, 1
    %v528 = vsel %vm275, %v526, %v527
    %v529 = vsel %vm275, %v527, %v526
    %v530 = vadd.f32 %v525, %v528
    %v531 = vadd.f32 %v524, %v529
    %v532 = vadd.f32 %v530, %v421
    %v533 = vadd.f32 %v531, %v423
    %v534 = vadd.f32 %v532, %v425
    %v535 = vadd.f32 %v533, %v427
    %v536 = vmul.f32 %v418, 4.0
    %v537 = vmul.f32 %v419, 4.0
    %v538 = vsub.f32 %v534, %v536
    %v539 = vsub.f32 %v535, %v537
    %v540 = vsub.f32 %v280, %v418
    %v541 = vsub.f32 %v281, %v419
    %v542 = vadd.f32 %v540, %v520
    %v543 = vadd.f32 %v541, %v521
    %v544 = vmul.f32 %v415, %v538
    %v545 = vmul.f32 %v415, %v539
    %v546 = vadd.f32 %v542, %v544
    %v547 = vadd.f32 %v543, %v545
    %548 = vrot.lane.b32.xlu0 %v546, 1
    %v549 = vpop.permute.xlu0 %548
    %550 = vrot.lane.b32.xlu0 %v547, 1
    %v551 = vpop.permute.xlu0 %550
    %552 = vrot.lane.b32.xlu0 %v546, 127
    %v553 = vpop.permute.xlu0 %552
    %554 = vrot.lane.b32.xlu0 %v547, 127
    %v555 = vpop.permute.xlu0 %554
    %v556 = vmul.f32 %v290, %v549
    %v557 = vmul.f32 %v290, %v551
    %v558 = vmul.f32 %v293, %v546
    %v559 = vmul.f32 %v293, %v547
    %v560 = vadd.f32 %v556, %v558
    %v561 = vadd.f32 %v557, %v559
    %v562 = vmul.f32 %v298, %v553
    %v563 = vmul.f32 %v298, %v555
    %v564 = vadd.f32 %v560, %v562
    %v565 = vadd.f32 %v561, %v563
    %v566 = vrot.slane %v564, 7
    %v567 = vrot.slane %v565, 7
    %v568 = vsel %vm210, %v566, %v567
    %v569 = vsel %vm210, %v567, %v566
    %v570 = vmul.f32 %v307, %v549
    %v571 = vmul.f32 %v307, %v551
    %v572 = vmul.f32 %v310, %v546
    %v573 = vmul.f32 %v310, %v547
    %v574 = vadd.f32 %v570, %v572
    %v575 = vadd.f32 %v571, %v573
    %v576 = vmul.f32 %v315, %v553
    %v577 = vmul.f32 %v315, %v555
    %v578 = vadd.f32 %v574, %v576
    %v579 = vadd.f32 %v575, %v577
    %v580 = vadd.f32 %v569, %v578
    %v581 = vadd.f32 %v568, %v579
    %v582 = vmul.f32 %v322, %v549
    %v583 = vmul.f32 %v322, %v551
    %v584 = vmul.f32 %v325, %v546
    %v585 = vmul.f32 %v325, %v547
    %v586 = vadd.f32 %v582, %v584
    %v587 = vadd.f32 %v583, %v585
    %v588 = vmul.f32 %v330, %v553
    %v589 = vmul.f32 %v330, %v555
    %v590 = vadd.f32 %v586, %v588
    %v591 = vadd.f32 %v587, %v589
    %v592 = vrot.slane %v590, 1
    %v593 = vrot.slane %v591, 1
    %v594 = vsel %vm275, %v592, %v593
    %v595 = vsel %vm275, %v593, %v592
    %v596 = vadd.f32 %v580, %v594
    %v597 = vadd.f32 %v581, %v595
    %v598 = vsel %vm196, %v596, 0.0
    %v599 = vsel %vm197, %v597, 0.0
    %600 = vrot.lane.b32.xlu0 %v598, 1
    %v601 = vpop.permute.xlu0 %600
    %602 = vrot.lane.b32.xlu0 %v599, 1
    %v603 = vpop.permute.xlu0 %602
    %604 = vrot.lane.b32.xlu0 %v598, 127
    %v605 = vpop.permute.xlu0 %604
    %606 = vrot.lane.b32.xlu0 %v599, 127
    %v607 = vpop.permute.xlu0 %606
    %v608 = vmul.f32 %v228, %v601
    %v609 = vmul.f32 %v228, %v603
    %v610 = vmul.f32 %v231, %v598
    %v611 = vmul.f32 %v231, %v599
    %v612 = vadd.f32 %v608, %v610
    %v613 = vadd.f32 %v609, %v611
    %v614 = vmul.f32 %v236, %v605
    %v615 = vmul.f32 %v236, %v607
    %v616 = vadd.f32 %v612, %v614
    %v617 = vadd.f32 %v613, %v615
    %v618 = vrot.slane %v616, 7
    %v619 = vrot.slane %v617, 7
    %v620 = vsel %vm210, %v618, %v619
    %v621 = vsel %vm210, %v619, %v618
    %v622 = vmul.f32 %v245, %v601
    %v623 = vmul.f32 %v245, %v603
    %v624 = vmul.f32 %v248, %v598
    %v625 = vmul.f32 %v248, %v599
    %v626 = vadd.f32 %v622, %v624
    %v627 = vadd.f32 %v623, %v625
    %v628 = vmul.f32 %v253, %v605
    %v629 = vmul.f32 %v253, %v607
    %v630 = vadd.f32 %v626, %v628
    %v631 = vadd.f32 %v627, %v629
    %v632 = vadd.f32 %v621, %v630
    %v633 = vadd.f32 %v620, %v631
    %v634 = vmul.f32 %v260, %v601
    %v635 = vmul.f32 %v260, %v603
    %v636 = vmul.f32 %v263, %v598
    %v637 = vmul.f32 %v263, %v599
    %v638 = vadd.f32 %v634, %v636
    %v639 = vadd.f32 %v635, %v637
    %v640 = vmul.f32 %v268, %v605
    %v641 = vmul.f32 %v268, %v607
    %v642 = vadd.f32 %v638, %v640
    %v643 = vadd.f32 %v639, %v641
    %v644 = vrot.slane %v642, 1
    %v645 = vrot.slane %v643, 1
    %v646 = vsel %vm275, %v644, %v645
    %v647 = vsel %vm275, %v645, %v644
    %v648 = vadd.f32 %v632, %v646
    %v649 = vadd.f32 %v633, %v647
    %v650 = vrot.slane %v546, 7
    %v651 = vrot.slane %v547, 7
    %v652 = vsel %vm210, %v650, %v651
    %v653 = vsel %vm210, %v651, %v650
    %v654 = vrot.slane %v546, 1
    %v655 = vrot.slane %v547, 1
    %v656 = vsel %vm275, %v654, %v655
    %v657 = vsel %vm275, %v655, %v654
    %v658 = vadd.f32 %v653, %v656
    %v659 = vadd.f32 %v652, %v657
    %v660 = vadd.f32 %v658, %v549
    %v661 = vadd.f32 %v659, %v551
    %v662 = vadd.f32 %v660, %v553
    %v663 = vadd.f32 %v661, %v555
    %v664 = vmul.f32 %v546, 4.0
    %v665 = vmul.f32 %v547, 4.0
    %v666 = vsub.f32 %v662, %v664
    %v667 = vsub.f32 %v663, %v665
    %v668 = vsub.f32 %v280, %v546
    %v669 = vsub.f32 %v281, %v547
    %v670 = vadd.f32 %v668, %v648
    %v671 = vadd.f32 %v669, %v649
    %v672 = vmul.f32 %v415, %v666
    %v673 = vmul.f32 %v415, %v667
    %v674 = vadd.f32 %v670, %v672
    %v675 = vadd.f32 %v671, %v673
    %676 = vst [vmem:[#allocation14] sm:$0xff] %v674
    %677 = vst [vmem:[#allocation14 + $0x8] sm:$0xff] %v675
    %678 = vrot.lane.b32.xlu0 %v674, 127
    %v679 = vpop.permute.xlu0 %678
    %680 = vrot.lane.b32.xlu0 %v675, 127
    %v681 = vpop.permute.xlu0 %680
    %v682 = vsub.f32 %v679, %v674
    %v683 = vsub.f32 %v681, %v675
    %v684 = vrot.slane %v674, 1
    %v685 = vrot.slane %v675, 1
    %v686 = vsel %vm275, %v684, %v685
    %v687 = vsel %vm275, %v685, %v684
    %v688 = vsub.f32 %v686, %v674
    %v689 = vsub.f32 %v687, %v675
    %v690 = vadd.f32 %v682, %v146
    %v691 = vadd.f32 %v683, %v147
    %v692 = vadd.f32 %v688, %v148
    %v693 = vadd.f32 %v689, %v149
    %v694 = vmul.f32 %v690, %v690
    %v695 = vmul.f32 %v691, %v691
    %v696 = vmul.f32 %v692, %v692
    %v697 = vmul.f32 %v693, %v693
    %v698 = vadd.f32 %v694, %v696
    %v699 = vadd.f32 %v695, %v697
    %v700 = vstv %s123
    %vm701 = vcmp.gt.f32.partialorder %v698, %v700
    %vm702 = vcmp.gt.f32.partialorder %v699, %v700
    %v703 = vrsqrt.pop %v698
    %v704 = vrsqrt.pop %v699
    %v705 = vstv %s122
    %v706 = vmul.f32 %v705, %v703
    %v707 = vmul.f32 %v705, %v704
    %v708 = vsub.f32 1.0, %v706
    %v709 = vsub.f32 1.0, %v707
    %v710 = vsel %vm701, %v708, 0.0
    %v711 = vsel %vm702, %v709, 0.0
    %v712 = vmul.f32 %v710, %v690
    %v713 = vmul.f32 %v711, %v691
    %714 = vst [vmem:[#allocation15] sm:$0xff] %v712
    %715 = vst [vmem:[#allocation15 + $0x8] sm:$0xff] %v713
    %v716 = vsub.f32 %v690, %v712
    %v717 = vsub.f32 %v691, %v713
    %718 = vst [vmem:[#allocation18] sm:$0xff] %v716
    %719 = vst [vmem:[#allocation18 + $0x8] sm:$0xff] %v717
    %v720 = vmul.f32 %v710, %v692
    %v721 = vmul.f32 %v711, %v693
    %722 = vst [vmem:[#allocation17] sm:$0xff] %v720
    %723 = vst [vmem:[#allocation17 + $0x8] sm:$0xff] %v721
    %v724 = vsub.f32 %v692, %v720
    %v725 = vsub.f32 %v693, %v721
    %726 = vst [vmem:[#allocation20] sm:$0xff] %v724
    %727 = vst [vmem:[#allocation20 + $0x8] sm:$0xff] %v725
    // Predicated region
    $region54: #{iteration_forward.1} parent=1 // pred_check
      _
    $region55: #{iteration_forward.1} parent=1 // pred_check_branch
      %729 = sbr.rel (0) target = $region57
    $region56: #{iteration_forward.1} parent=1 // pred_region
      %s731 = ssub.s32 256, 256
      %732 = vsyncadd [#allocation4], %s731
      %s733 = sshll.u32 [#allocation14], 4
      %s734 = int_to_ptr.vmem [resolvable:$true] %s733
      %739 = dma.vmem_to_hbm [thread:$0]  %s734, 256, %s7, [#allocation4], 128, 128, 8
    $region57: #{iteration_forward.1} parent=1 // pred_fallthru
      _
    // Predicated region
    $region58: #{iteration_forward.1} parent=1 // pred_check
      _
    $region59: #{iteration_forward.1} parent=1 // pred_check_branch
      %741 = sbr.rel (0) target = $region61
    $region60: #{iteration_forward.1} parent=1 // pred_region
      %s743 = ssub.s32 256, 256
      %744 = vsyncadd [#allocation16], %s743
      %s745 = sshll.u32 [#allocation15], 4
      %s746 = int_to_ptr.vmem [resolvable:$true] %s745
      %751 = dma.vmem_to_hbm [thread:$0]  %s746, 256, %s8, [#allocation16], 128, 128, 8
    $region61: #{iteration_forward.1} parent=1 // pred_fallthru
      _
    // Predicated region
    $region62: #{iteration_forward.1} parent=1 // pred_check
      _
    $region63: #{iteration_forward.1} parent=1 // pred_check_branch
      %753 = sbr.rel (0) target = $region65
    $region64: #{iteration_forward.1} parent=1 // pred_region
      %s755 = ssub.s32 256, 256
      %756 = vsyncadd [#allocation16], %s755
      %s757 = sshll.u32 [#allocation17], 4
      %s758 = int_to_ptr.vmem [resolvable:$true] %s757
      %763 = dma.vmem_to_hbm [thread:$0]  %s758, 256, %s9, [#allocation16], 128, 128, 8
    $region65: #{iteration_forward.1} parent=1 // pred_fallthru
      _
    // Predicated region
    $region66: #{iteration_forward.1} parent=1 // pred_check
      _
    $region67: #{iteration_forward.1} parent=1 // pred_check_branch
      %765 = sbr.rel (0) target = $region69
    $region68: #{iteration_forward.1} parent=1 // pred_region
      %s767 = ssub.s32 256, 256
      %768 = vsyncadd [#allocation19], %s767
      %s769 = sshll.u32 [#allocation18], 4
      %s770 = int_to_ptr.vmem [resolvable:$true] %s769
      %775 = dma.vmem_to_hbm [thread:$0]  %s770, 256, %s10, [#allocation19], 128, 128, 8
    $region69: #{iteration_forward.1} parent=1 // pred_fallthru
      _
    // Predicated region
    $region70: #{iteration_forward.1} parent=1 // pred_check
      _
    $region71: #{iteration_forward.1} parent=1 // pred_check_branch
      %777 = sbr.rel (0) target = $region73
    $region72: #{iteration_forward.1} parent=1 // pred_region
      %s779 = ssub.s32 256, 256
      %780 = vsyncadd [#allocation19], %s779
      %s781 = sshll.u32 [#allocation20], 4
      %s782 = int_to_ptr.vmem [resolvable:$true] %s781
      %787 = dma.vmem_to_hbm [thread:$0]  %s782, 256, %s11, [#allocation19], 128, 128, 8
    $region73: #{iteration_forward.1} parent=1 // pred_fallthru
      _
    // Predicated region
    $region74: #{iteration_forward.1} parent=1 // pred_check
      _
    $region75: #{iteration_forward.1} parent=1 // pred_check_branch
      %789 = sbr.rel (0) target = $region77
    $region76: #{iteration_forward.1} parent=1 // pred_region
      %790 = dma.done [#allocation4], 256
    $region77: #{iteration_forward.1} parent=1 // pred_fallthru
      _
    // Predicated region
    $region78: #{iteration_forward.1} parent=1 // pred_check
      _
    $region79: #{iteration_forward.1} parent=1 // pred_check_branch
      %792 = sbr.rel (0) target = $region81
    $region80: #{iteration_forward.1} parent=1 // pred_region
      %793 = dma.done [#allocation16], 256
    $region81: #{iteration_forward.1} parent=1 // pred_fallthru
      _
    // Predicated region
    $region82: #{iteration_forward.1} parent=1 // pred_check
      _
    $region83: #{iteration_forward.1} parent=1 // pred_check_branch
      %795 = sbr.rel (0) target = $region85
    $region84: #{iteration_forward.1} parent=1 // pred_region
      %796 = dma.done [#allocation16], 256
    $region85: #{iteration_forward.1} parent=1 // pred_fallthru
      _
    // Predicated region
    $region86: #{iteration_forward.1} parent=1 // pred_check
      _
    $region87: #{iteration_forward.1} parent=1 // pred_check_branch
      %798 = sbr.rel (0) target = $region89
    $region88: #{iteration_forward.1} parent=1 // pred_region
      %799 = dma.done [#allocation19], 256
    $region89: #{iteration_forward.1} parent=1 // pred_fallthru
      _
    // Predicated region
    $region90: #{iteration_forward.1} parent=1 // pred_check
      _
    $region91: #{iteration_forward.1} parent=1 // pred_check_branch
      %801 = sbr.rel (0) target = $region93
    $region92: #{iteration_forward.1} parent=1 // pred_region
      %802 = dma.done [#allocation19], 256
    $region93: #{iteration_forward.1} parent=1 // pred_fallthru
      _
    %803 = vsyncpa [#allocation3], 1
    %804 = vsyncpa [#allocation10], 1
    %805 = vsyncpa [#allocation13], 1
    %806 = vsyncpa [#allocation4], 1
    %807 = vsyncpa [#allocation16], 1
    %808 = vsyncpa [#allocation19], 1
    %809 = vsyncpa [#allocation5], 1
    %810 = vsyncpa [#allocation7], 1

</llo_original>
